<compile_context>
chip_gen: v6e
topology: v6e:2x2x1
jax: 0.10.0
libtpu: 0.0.40
codegen_flags: <defaults>
</compile_context>

<pallas_src>
import jax
import jax.numpy as jnp
from jax.experimental import pallas as pl
from jax.experimental.pallas import tpu as pltpu

# ----- module config (Involution3d defaults, except channel counts) -----
IN_CHANNELS = 4
OUT_CHANNELS = 8
KERNEL_SIZE = (1, 1, 1)
STRIDE = (1, 1, 1)
PADDING = (0, 0, 0)
DILATION = (1, 1, 1)
GROUPS = 1
BIAS = False
K_TOTAL = KERNEL_SIZE[0] * KERNEL_SIZE[1] * KERNEL_SIZE[2] * GROUPS  # weight channels


def _round_up(n, m):
    return ((n + m - 1) // m) * m


def involution3d_kernel(x_ref, wct_ref, wgt_ref, o_ref):
    # x_ref:   (C_in,  tile_s)  input channels (sublanes) x spatial points (lanes)
    # wct_ref: (C_out, C_in)    1x1x1 conv weight in torch [C_out, C_in] layout (resident)
    # wgt_ref: (K=1,   tile_s)  involution weight, single kernel tap
    # o_ref:   (C_out, tile_s)
    x_init = jnp.dot(wct_ref[...], x_ref[...], preferred_element_type=jnp.float32)
    # K == 1: torch's (kernel * unfolded).sum(dim=3) is a plain broadcast multiply.
    o_ref[...] = (x_init * wgt_ref[...].astype(jnp.float32)).astype(o_ref.dtype)


def involution3d(x, weight, conv_w, *, tile_s=65536, min_grid_steps=2):
    """x: [B, C_in, D, H, W], weight: [B, K, D, H, W], conv_w: [C_in, C_out]."""
    B, C_in, D, H, W = x.shape
    Bw, K, Dw, Hw, Ww = weight.shape
    assert (Bw, Dw, Hw, Ww) == (B, D, H, W)
    assert K == K_TOTAL == 1, "only the default kernel_size=(1,1,1), groups=1 path"
    C_in_w, C_out = conv_w.shape
    assert C_in_w == C_in

    S = D * H * W
    # Native layout, no transposes: NCDHW -> [B, C, S] is a pure (free) reshape.
    x_flat = x.reshape(B, C_in, S)
    w_flat = weight.reshape(B, K, S)

    # Lane tile: large (kernel is HBM-bound, amortize per-step pipeline overhead),
    # 128-aligned, never larger than the 128-rounded spatial extent.
    tile = min(_round_up(tile_s, 128), _round_up(S, 128))
    # v7x has 2 TensorCores and "parallel" grid axes shard across them: make sure
    # there are at least `min_grid_steps` grid steps, otherwise split the spatial axis.
    if B * pl.cdiv(S, tile) < min_grid_steps and S > 128:
        tile = _round_up(pl.cdiv(S, min_grid_steps), 128)
    n_s = pl.cdiv(S, tile)          # partial last block handled by Pallas (no pad/slice)
    grid = (B, n_s)

    # torch Conv3d weight layout [C_out, C_in] so the dot is (C_out,C_in)@(C_in,tile).
    conv_w_t = conv_w.T  # tiny (C_out, C_in); constant index_map keeps it VMEM-resident.

    itemsize = jnp.dtype(x.dtype).itemsize

    # Honest double-buffered VMEM footprint: every streamed block occupies a full
    # 8-sublane slab in VMEM, so the (C_in,tile), (1,tile) and (C_out,tile) blocks
    # each cost ceil(c/8)*8 * tile * itemsize per buffer.
    def _sub(c):
        return _round_up(max(c, 1), 8)

    footprint = 2 * (_sub(C_in) + _sub(K) + _sub(C_out)) * tile * itemsize
    vmem_limit = int(min(64 << 20, max(32 << 20, 2 * footprint)))

    flops = 2 * B * S * C_in * C_out + B * S * C_out
    bytes_accessed = (B * S * (C_in + K + C_out) + C_in * C_out) * itemsize
    cost = pl.CostEstimate(flops=flops, transcendentals=0, bytes_accessed=bytes_accessed)

    out_flat = pl.pallas_call(
        involution3d_kernel,
        out_shape=jax.ShapeDtypeStruct((B, C_out, S), x.dtype),
        grid_spec=pltpu.PrefetchScalarGridSpec(
            num_scalar_prefetch=0,
            grid=grid,
            in_specs=[
                pl.BlockSpec((None, C_in, tile), lambda b, s: (b, 0, s)),
                pl.BlockSpec((C_out, C_in), lambda b, s: (0, 0)),
                pl.BlockSpec((None, K, tile), lambda b, s: (b, 0, s)),
            ],
            out_specs=pl.BlockSpec((None, C_out, tile), lambda b, s: (b, 0, s)),
        ),
        compiler_params=pltpu.CompilerParams(
            dimension_semantics=("parallel", "parallel"),
            vmem_limit_bytes=vmem_limit,
        ),
        cost_estimate=cost,
    )(x_flat, conv_w_t, w_flat)

    return out_flat.reshape(B, C_out, D, H, W)


def involution3d_reference(x, weight, conv_w):
    """Pure-JAX replica of the torch forward (defaults path) for verification."""
    x_init = jnp.einsum("bcdhw,co->bodhw", x, conv_w)   # 1x1x1 conv, no bias
    w_sum = jnp.sum(weight, axis=1, keepdims=True)      # sum over K (dim=3 in torch)
    return x_init * w_sum


if __name__ == "__main__":
    key = jax.random.PRNGKey(0)
    k1, k2, k3 = jax.random.split(key, 3)

    # initial_mapping: Conv3d(C_in -> C_out, 1x1x1, bias=False); torch weight is
    # [C_out, C_in, 1, 1, 1] — store it transposed/squeezed as [C_in, C_out].
    conv_w_torch = jax.random.normal(k3, (OUT_CHANNELS, IN_CHANNELS), dtype=jnp.float32) * 0.1
    conv_w = conv_w_torch.T  # [C_in, C_out]

    # --- main test: tile-divisible spatial extent, batch sharded over the grid ---
    B, D, H, W = 2, 16, 16, 16
    x = jax.random.normal(k1, (B, IN_CHANNELS, D, H, W), dtype=jnp.float32)
    weight = jax.random.normal(k2, (B, K_TOTAL, D, H, W), dtype=jnp.float32)

    out = jax.block_until_ready(involution3d(x, weight, conv_w))
    ref = involution3d_reference(x, weight, conv_w)
    assert out.shape == (B, OUT_CHANNELS, D, H, W)
    assert jnp.allclose(out, ref, atol=1e-5, rtol=1e-5)

    # --- tail test: non-tile-divisible S, batch=1 (exercises the no-pad partial
    #     last block and the >=2-grid-step spatial split for v7x's 2 TCs) ---
    B2, D2, H2, W2 = 1, 8, 8, 9   # S = 576
    x2 = jax.random.normal(k1, (B2, IN_CHANNELS, D2, H2, W2), dtype=jnp.float32)
    w2 = jax.random.normal(k2, (B2, K_TOTAL, D2, H2, W2), dtype=jnp.float32)
    ref2 = involution3d_reference(x2, w2, conv_w)

    out2 = jax.block_until_ready(involution3d(x2, w2, conv_w, tile_s=256))  # 3 tiles, partial tail
    assert jnp.allclose(out2, ref2, atol=1e-5, rtol=1e-5)

    out3 = jax.block_until_ready(involution3d(x2, w2, conv_w))  # default tile -> forced 2-way split
    assert jnp.allclose(out3, ref2, atol=1e-5, rtol=1e-5)

    print("KERNEL_OK")
</pallas_src>

<mosaic_0001>
module attributes {stable_mosaic.version = 11 : i64} {
  func.func @involution3d_kernel(%arg0: i32, %arg1: i32, %arg2: memref<1x4x4096xf32, #tpu.memory_space<vmem>>, %arg3: memref<8x4xf32, #tpu.memory_space<vmem>>, %arg4: memref<1x1x4096xf32, #tpu.memory_space<vmem>>, %arg5: memref<1x8x4096xf32, #tpu.memory_space<vmem>>) attributes {dimension_semantics = [#tpu.dimension_semantics<parallel>, #tpu.dimension_semantics<parallel>], iteration_bounds = array<i64: 2, 1>, scalar_prefetch = 0 : i64, scratch_operands = 0 : i64, tpu.core_type = #tpu.core_type<tc>, window_params = [{transform_indices = @transform_0, window_bounds = array<i64: 1, 4, 4096>}, {pipeline_mode = #tpu.pipeline_mode<synchronous>, transform_indices = @transform_1, window_bounds = array<i64: 8, 4>}, {transform_indices = @transform_2, window_bounds = array<i64: 1, 1, 4096>}, {transform_indices = @transform_3, window_bounds = array<i64: 1, 8, 4096>}]} {
    %c0 = arith.constant 0 : index
    %c0_0 = arith.constant 0 : index
    %0 = vector.load %arg3[%c0, %c0_0] : memref<8x4xf32, #tpu.memory_space<vmem>>, vector<8x4xf32>
    %c0_1 = arith.constant 0 : index
    %c0_2 = arith.constant 0 : index
    %c0_3 = arith.constant 0 : index
    %1 = vector.load %arg2[%c0_1, %c0_2, %c0_3] : memref<1x4x4096xf32, #tpu.memory_space<vmem>>, vector<1x4x4096xf32>
    %2 = vector.shape_cast %1 : vector<1x4x4096xf32> to vector<4x4096xf32>
    %cst = arith.constant dense<0.000000e+00> : vector<8x4096xf32>
    %3 = tpu.matmul %0, %2, %cst {dimension_numbers = #tpu.dot_dimension_numbers<[1], [0], [0], [1], [0, 0, 1, 1], [], []>} : vector<8x4xf32>, vector<4x4096xf32>, vector<8x4096xf32> -> vector<8x4096xf32>
    %c0_4 = arith.constant 0 : index
    %c0_5 = arith.constant 0 : index
    %c0_6 = arith.constant 0 : index
    %4 = vector.load %arg4[%c0_4, %c0_5, %c0_6] : memref<1x1x4096xf32, #tpu.memory_space<vmem>>, vector<1x1x4096xf32>
    %5 = vector.shape_cast %4 : vector<1x1x4096xf32> to vector<1x4096xf32>
    %6 = vector.broadcast %5 : vector<1x4096xf32> to vector<8x4096xf32>
    %7 = arith.mulf %3, %6 : vector<8x4096xf32>
    %c0_7 = arith.constant 0 : index
    %c0_8 = arith.constant 0 : index
    %c0_9 = arith.constant 0 : index
    %8 = vector.load %arg5[%c0_7, %c0_8, %c0_9] : memref<1x8x4096xf32, #tpu.memory_space<vmem>>, vector<1x8x4096xf32>
    %9 = vector.shape_cast %8 : vector<1x8x4096xf32> to vector<8x4096xf32>
    %10 = vector.shape_cast %7 : vector<8x4096xf32> to vector<1x8x4096xf32>
    tpu.vector_store %arg5[%c0_7, %c0_8, %c0_9], %10 {strides = array<i32>} : memref<1x8x4096xf32, #tpu.memory_space<vmem>>, vector<1x8x4096xf32>,
    return
  }
  func.func @transform_0(%arg0: i32, %arg1: i32) -> (i32, i32, i32) {
    %c0_i32 = arith.constant 0 : i32
    %c0_i32_0 = arith.constant 0 : i32
    return %arg0, %c0_i32, %arg1 : i32, i32, i32
  }
  func.func @transform_1(%arg0: i32, %arg1: i32) -> (i32, i32) {
    %c0_i32 = arith.constant 0 : i32
    %c0_i32_0 = arith.constant 0 : i32
    %c0_i32_1 = arith.constant 0 : i32
    return %c0_i32, %c0_i32_0 : i32, i32
  }
  func.func @transform_2(%arg0: i32, %arg1: i32) -> (i32, i32, i32) {
    %c0_i32 = arith.constant 0 : i32
    %c0_i32_0 = arith.constant 0 : i32
    return %arg0, %c0_i32, %arg1 : i32, i32, i32
  }
  func.func @transform_3(%arg0: i32, %arg1: i32) -> (i32, i32, i32) {
    %c0_i32 = arith.constant 0 : i32
    %c0_i32_0 = arith.constant 0 : i32
    return %arg0, %c0_i32, %arg1 : i32, i32, i32
  }
}

</mosaic_0001>

<llo_original>
// kernel: tpu_custom_call.1
$region0: #{tpu_custom_call.1}
  #allocation0 [shape = 'u32[]', space=smem, size = 0x4, offset = 0x4, fixed_abs, tag = 'smem constant byte address 0x4 - core index']
  #allocation1 [shape = 'u32[144,128]{1,0:T(1,128)}', space=vmem, size = 0x12000, scoped, tag = 'internal scratch']
  %s0 = inlined_call_operand.hbm [shape: f32[2,4,4096], index: 0, kind: input, shape index: {}]
  %s1 = inlined_call_operand.vmem [shape: f32[8,4], index: 1, kind: input, shape index: {}]
  %s2 = inlined_call_operand.hbm [shape: f32[2,1,4096], index: 2, kind: input, shape index: {}]
  %s3 = inlined_call_operand.hbm [shape: f32[2,8,4096], index: 3, kind: output, shape index: {}]
  %s4 = sld [smem:[#allocation0]]
  $region53: #{tpu_custom_call.1} parent=0
    _
  %s6 = ssub.s32 1, %s4
  %s7 = scalar_select 0, %s6, %s4
  $region1: #{tpu_custom_call.1} parent=0
    #allocation2 [shape = 'u8[131072]{0}', space=vmem, size = 0x20000, scoped, tag = 'input window, operand 0']
    #allocation3 [shape = 's32[2]{0}', space=sflag, size = 0x8, scoped, tag = 'scoped memory for tpu_custom_call.1']
    #allocation4 [shape = 's32[2]{0}', space=sflag, size = 0x8, scoped, tag = 'scoped memory for tpu_custom_call.1']
    #allocation5 [shape = 'u8[32768]{0}', space=vmem, size = 0x8000, scoped, tag = 'input window, operand 2']
    #allocation6 [shape = 's32[2]{0}', space=sflag, size = 0x8, scoped, tag = 'scoped memory for tpu_custom_call.1']
    #allocation7 [shape = 'u8[262144]{0}', space=vmem, size = 0x40000, scoped, tag = 'output window, operand 0']
    %8 = vsyncpa [#allocation3], 0
    %s9 = scalar_lea.sflag [#allocation3], 1
    %10 = vsyncpa %s9, 0
    %11 = vsyncpa [#allocation6], 0
    %s12 = scalar_lea.sflag [#allocation6], 1
    %13 = vsyncpa %s12, 0
    %14 = vsyncpa [#allocation4], 0
    %s15 = scalar_lea.sflag [#allocation4], 1
    %16 = vsyncpa %s15, 0
    loop: start=0, step=1, limit=4
    $region2: #{tpu_custom_call.1} parent=1 // loop_pre_header
      _
    $region3: #{tpu_custom_call.1} parent=1 // loop_header
      %s18 = sphi 0, %s22
      %p19 = scmp.ge.s32.totalorder %s18, 4
      %s25 = sphi 0, %s37
      %s26 = sphi 0, %s33
      %s27 = sphi 0, %s25
      %s28 = sphi 0, %s26
      %s29 = sphi 0, %s27
      %s30 = sphi 0, %s28
      %s42 = sphi 0, %s44
      %s45 = sphi 0, %s42
      %s46 = sphi 0, %s45
      %s62 = sphi 0, %s46
      %s66 = sphi 0, %s66
      %s68 = sphi 0, %s66
      %s69 = sphi 0, %s68
      %s83 = sphi 0, %s69
      %s91 = sphi 0, %s93
      %s94 = sphi 0, %s91
      %s95 = sphi 0, %s94
      %s111 = sphi 0, %s95
      %s119 = sphi 0, %s121
      %s122 = sphi 0, %s119
      %s123 = sphi 0, %s122
      %s139 = sphi 0, %s123
    $region4: #{tpu_custom_call.1} parent=1 // loop_header_branch
      %21 = sbr.rel (%p19) target = $region8
    $region5: #{tpu_custom_call.1} parent=1 // loop_body
      %s23 = ssub.s32 %s18, 1
      %s24 = ssub.s32 %s18, 2
      %s31 = sadd.s32 1, %s26
      %p32 = scmp.ge.s32.totalorder %s31, 1
      %s33 = scalar_select %p32, 0, %s31
      %s34 = sadd.s32 1, %s25
      %s35 = scalar_select %p32, %s34, %s25
      %p36 = scmp.ge.s32.totalorder %s35, 2
      %s37 = scalar_select %p36, 0, %s35
      %s38 = ssub.s32 %s25, %s37
      %s39 = ssub.s32 %s26, %s33
      %s40 = sor.u32 %s38, %s39
      %p41 = scmp.eq.s32.totalorder %s40, 0
      %s43 = sadd.s32 %s42, 1
      %s44 = scalar_select %p41, %s42, %s43
      %p47 = pneg %p41
      %p48 = scmp.eq.s32.totalorder %s18, 1
      %p49 = por %p47, %p48
      %p50 = scmp.ne.s32.totalorder %s42, %s45
      %p51 = scmp.eq.s32.totalorder %s18, 0
      %p52 = por %p50, %p51
      %p53 = scmp.ne.s32.totalorder %s42, %s45
      %p54 = scmp.eq.s32.totalorder %s23, 1
      %p55 = por %p53, %p54
      %p56 = scmp.ne.s32.totalorder %s45, %s46
      %p57 = scmp.eq.s32.totalorder %s23, 0
      %p58 = por %p56, %p57
      %p59 = scmp.ne.s32.totalorder %s45, %s46
      %p60 = scmp.eq.s32.totalorder %s24, 1
      %p61 = por %p59, %p60
      %p63 = scmp.ne.s32.totalorder %s46, %s62
      %p64 = scmp.eq.s32.totalorder %s24, 0
      %p65 = por %p63, %p64
      %s67 = sadd.s32 %s66, 1
      %p70 = scmp.eq.s32.totalorder %s18, 1
      %p71 = scmp.ne.s32.totalorder %s66, %s68
      %p72 = scmp.eq.s32.totalorder %s18, 0
      %p73 = por %p71, %p72
      %p74 = scmp.ne.s32.totalorder %s66, %s68
      %p75 = scmp.eq.s32.totalorder %s23, 1
      %p76 = por %p74, %p75
      %p77 = scmp.ne.s32.totalorder %s68, %s69
      %p78 = scmp.eq.s32.totalorder %s23, 0
      %p79 = por %p77, %p78
      %p80 = scmp.ne.s32.totalorder %s68, %s69
      %p81 = scmp.eq.s32.totalorder %s24, 1
      %p82 = por %p80, %p81
      %p84 = scmp.ne.s32.totalorder %s69, %s83
      %p85 = scmp.eq.s32.totalorder %s24, 0
      %p86 = por %p84, %p85
      %s87 = ssub.s32 %s25, %s37
      %s88 = ssub.s32 %s26, %s33
      %s89 = sor.u32 %s87, %s88
      %p90 = scmp.eq.s32.totalorder %s89, 0
      %s92 = sadd.s32 %s91, 1
      %s93 = scalar_select %p90, %s91, %s92
      %p96 = pneg %p90
      %p97 = scmp.eq.s32.totalorder %s18, 1
      %p98 = por %p96, %p97
      %p99 = scmp.ne.s32.totalorder %s91, %s94
      %p100 = scmp.eq.s32.totalorder %s18, 0
      %p101 = por %p99, %p100
      %p102 = scmp.ne.s32.totalorder %s91, %s94
      %p103 = scmp.eq.s32.totalorder %s23, 1
      %p104 = por %p102, %p103
      %p105 = scmp.ne.s32.totalorder %s94, %s95
      %p106 = scmp.eq.s32.totalorder %s23, 0
      %p107 = por %p105, %p106
      %p108 = scmp.ne.s32.totalorder %s94, %s95
      %p109 = scmp.eq.s32.totalorder %s24, 1
      %p110 = por %p108, %p109
      %p112 = scmp.ne.s32.totalorder %s95, %s111
      %p113 = scmp.eq.s32.totalorder %s24, 0
      %p114 = por %p112, %p113
      %s115 = ssub.s32 %s25, %s37
      %s116 = ssub.s32 %s26, %s33
      %s117 = sor.u32 %s115, %s116
      %p118 = scmp.eq.s32.totalorder %s117, 0
      %s120 = sadd.s32 %s119, 1
      %s121 = scalar_select %p118, %s119, %s120
      %p124 = pneg %p118
      %p125 = scmp.eq.s32.totalorder %s18, 1
      %p126 = por %p124, %p125
      %p127 = scmp.ne.s32.totalorder %s119, %s122
      %p128 = scmp.eq.s32.totalorder %s18, 0
      %p129 = por %p127, %p128
      %p130 = scmp.ne.s32.totalorder %s119, %s122
      %p131 = scmp.eq.s32.totalorder %s23, 1
      %p132 = por %p130, %p131
      %p133 = scmp.ne.s32.totalorder %s122, %s123
      %p134 = scmp.eq.s32.totalorder %s23, 0
      %p135 = por %p133, %p134
      %p136 = scmp.ne.s32.totalorder %s122, %s123
      %p137 = scmp.eq.s32.totalorder %s24, 1
      %p138 = por %p136, %p137
      %p140 = scmp.ne.s32.totalorder %s123, %s139
      %p141 = scmp.eq.s32.totalorder %s24, 0
      %p142 = por %p140, %p141
      %p143 = scmp.le.s32.totalorder 1, %s18
      %p144 = scmp.lt.s32.totalorder %s18, 3
      %p145 = pnand %p143, %p144
      %p146 = pneg %p145
      // Predicated region
      $region9: #{tpu_custom_call.1} parent=5 // pred_check
        _
      $region10: #{tpu_custom_call.1} parent=5 // pred_check_branch
        %148 = sbr.rel (%p145) target = $region12
      $region11: #{tpu_custom_call.1} parent=5 // pred_region
        %s149 = ssub.s32 %s18, 1
        // Predicated region
        $region13: #{tpu_custom_call.1} parent=11 // pred_check
          %p150 = pneg %p79
        $region14: #{tpu_custom_call.1} parent=11 // pred_check_branch
          %152 = sbr.rel (%p150) target = $region16
        $region15: #{tpu_custom_call.1} parent=11 // pred_region
          _
        $region16: #{tpu_custom_call.1} parent=11 // pred_fallthru
          _
      $region12: #{tpu_custom_call.1} parent=5 // pred_fallthru
        _
      %p153 = scmp.lt.s32.totalorder %s18, 2
      // Predicated region
      $region17: #{tpu_custom_call.1} parent=5 // pred_check
        %p154 = pneg %p153
      $region18: #{tpu_custom_call.1} parent=5 // pred_check_branch
        %156 = sbr.rel (%p154) target = $region20
      $region19: #{tpu_custom_call.1} parent=5 // pred_region
        // Predicated region
        $region21: #{tpu_custom_call.1} parent=19 // pred_check
          %p157 = pneg %p52
        $region22: #{tpu_custom_call.1} parent=19 // pred_check_branch
          %159 = sbr.rel (%p157) target = $region24
        $region23: #{tpu_custom_call.1} parent=19 // pred_region
          %s160 = sand.u32 %s42, 1
          %s161 = scalar_lea.sflag [#allocation3], %s160
          %s162 = sand.u32 %s42, 1
          %s163 = smul.addr %s162, 128
          %s164 = scalar_lea.vmem [#allocation2], %s163
          %s165 = smul.u32 32, %s26
          %s167 = ssub.s32 2048, 2048
          %168 = vsyncadd %s161, %s167
          %s169 = smul.addr %s25, 32
          %s170 = sadd.s32 %s165, %s169
          %s171 = smul.addr %s170, 64
          %s172 = scalar_lea.hbm %s0, %s171
          %s174 = sshll.u32 %s164, 4
          %s175 = int_to_ptr.vmem [resolvable:$true] %s174
          %177 = dma.hbm_to_vmem [thread:$0]  %s172, 2048, %s175, %s161
        $region24: #{tpu_custom_call.1} parent=19 // pred_fallthru
          _
        // Predicated region
        $region25: #{tpu_custom_call.1} parent=19 // pred_check
          %p178 = pneg %p101
        $region26: #{tpu_custom_call.1} parent=19 // pred_check_branch
          %180 = sbr.rel (%p178) target = $region28
        $region27: #{tpu_custom_call.1} parent=19 // pred_region
          %s181 = sand.u32 %s91, 1
          %s182 = scalar_lea.sflag [#allocation6], %s181
          %s183 = sand.u32 %s91, 1
          %s184 = smul.addr %s183, 32
          %s185 = scalar_lea.vmem [#allocation5], %s184
          %s186 = smul.u32 32, %s26
          %s188 = ssub.s32 512, 512
          %189 = vsyncadd %s182, %s188
          %s190 = smul.addr %s25, 32
          %s191 = sadd.s32 %s186, %s190
          %s192 = smul.addr %s191, 16
          %s193 = scalar_lea.hbm %s2, %s192
          %s195 = sshll.u32 %s185, 4
          %s196 = int_to_ptr.vmem [resolvable:$true] %s195
          %198 = dma.hbm_to_vmem [thread:$0]  %s193, 512, %s196, %s182
        $region28: #{tpu_custom_call.1} parent=19 // pred_fallthru
          _
      $region20: #{tpu_custom_call.1} parent=5 // pred_fallthru
        _
      %p199 = scmp.le.s32.totalorder 1, %s18
      %p200 = scmp.lt.s32.totalorder %s18, 3
      %p201 = pnand %p199, %p200
      %p202 = pneg %p201
      // Predicated region
      $region29: #{tpu_custom_call.1} parent=5 // pred_check
        _
      $region30: #{tpu_custom_call.1} parent=5 // pred_check_branch
        %204 = sbr.rel (%p201) target = $region32
      $region31: #{tpu_custom_call.1} parent=5 // pred_region
        %s205 = ssub.s32 %s18, 1
        %s206 = sand.u32 %s45, 1
        %s207 = scalar_lea.sflag [#allocation3], %s206
        %s208 = sand.u32 %s45, 1
        %s209 = smul.addr %s208, 128
        %s210 = scalar_lea.vmem [#allocation2], %s209
        // Predicated region
        $region33: #{tpu_custom_call.1} parent=31 // pred_check
          %p211 = pneg %p58
        $region34: #{tpu_custom_call.1} parent=31 // pred_check_branch
          %213 = sbr.rel (%p211) target = $region36
        $region35: #{tpu_custom_call.1} parent=31 // pred_region
          %214 = dma.done %s207, 2048
        $region36: #{tpu_custom_call.1} parent=31 // pred_fallthru
          _
        %s215 = sand.u32 %s94, 1
        %s216 = scalar_lea.sflag [#allocation6], %s215
        %s217 = sand.u32 %s94, 1
        %s218 = smul.addr %s217, 32
        %s219 = scalar_lea.vmem [#allocation5], %s218
        // Predicated region
        $region37: #{tpu_custom_call.1} parent=31 // pred_check
          %p220 = pneg %p107
        $region38: #{tpu_custom_call.1} parent=31 // pred_check_branch
          %222 = sbr.rel (%p220) target = $region40
        $region39: #{tpu_custom_call.1} parent=31 // pred_region
          %223 = dma.done %s216, 512
        $region40: #{tpu_custom_call.1} parent=31 // pred_fallthru
          _
        %s224 = sand.u32 %s45, 1
        %s225 = scalar_lea.sflag [#allocation3], %s224
        %s226 = sand.u32 %s45, 1
        %s227 = smul.addr %s226, 128
        %s228 = scalar_lea.vmem [#allocation2], %s227
        %p229 = pneg %p58
        %p230 = pneg %p55
        %p231 = pneg %p79
        %p232 = pneg %p76
        %s233 = sand.u32 %s94, 1
        %s234 = scalar_lea.sflag [#allocation6], %s233
        %s235 = sand.u32 %s94, 1
        %s236 = smul.addr %s235, 32
        %s237 = scalar_lea.vmem [#allocation5], %s236
        %p238 = pneg %p107
        %p239 = pneg %p104
        %p240 = pneg %p135
        %p241 = pneg %p132
        %s242 = sand.u32 %s122, 1
        %s243 = scalar_lea.sflag [#allocation4], %s242
        %s244 = sand.u32 %s122, 1
        %s245 = smul.addr %s244, 256
        %s246 = scalar_lea.vmem [#allocation7], %s245
        %s247 = smul.u32 32, %s28
        %s248 = smul.u32 32, %s28
        %s249 = smul.u32 32, %s28
        %v250 = vld [vmem:[%s1] sm:$0xff]
        %v251 = vld [vmem:[%s210] sm:$0xff]
        %v252 = vld [vmem:[%s210 + $0x8] sm:$0xff]
        %v253 = vld [vmem:[%s210 + $0x10] sm:$0xff]
        %v254 = vld [vmem:[%s210 + $0x18] sm:$0xff]
        %v255 = vld [vmem:[%s210 + $0x20] sm:$0xff]
        %v256 = vld [vmem:[%s210 + $0x28] sm:$0xff]
        %v257 = vld [vmem:[%s210 + $0x30] sm:$0xff]
        %v258 = vld [vmem:[%s210 + $0x38] sm:$0xff]
        %v259 = vld [vmem:[%s210 + $0x40] sm:$0xff]
        %v260 = vld [vmem:[%s210 + $0x48] sm:$0xff]
        %v261 = vld [vmem:[%s210 + $0x50] sm:$0xff]
        %v262 = vld [vmem:[%s210 + $0x58] sm:$0xff]
        %v263 = vld [vmem:[%s210 + $0x60] sm:$0xff]
        %v264 = vld [vmem:[%s210 + $0x68] sm:$0xff]
        %v265 = vld [vmem:[%s210 + $0x70] sm:$0xff]
        %v266 = vld [vmem:[%s210 + $0x78] sm:$0xff]
        %v283 = vcombine.high %v251, %v251
        %v284 = vcombine.high %v252, %v252
        %v285 = vcombine.high %v253, %v253
        %v286 = vcombine.high %v254, %v254
        %v287 = vcombine.high %v255, %v255
        %v288 = vcombine.high %v256, %v256
        %v289 = vcombine.high %v257, %v257
        %v290 = vcombine.high %v258, %v258
        %v291 = vcombine.high %v259, %v259
        %v292 = vcombine.high %v260, %v260
        %v293 = vcombine.high %v261, %v261
        %v294 = vcombine.high %v262, %v262
        %v295 = vcombine.high %v263, %v263
        %v296 = vcombine.high %v264, %v264
        %v297 = vcombine.high %v265, %v265
        %v298 = vcombine.high %v266, %v266
        %vm299 = vcmask 31744
        %v301 = vsel %vm299, %v250, 0
        %vm303 = vcmask 1043456
        %v304 = vsel %vm303, %v251, 0
        %v306 = vsel %vm303, %v283, 0
        %v308 = vsel %vm303, %v252, 0
        %v310 = vsel %vm303, %v284, 0
        %v312 = vsel %vm303, %v253, 0
        %v314 = vsel %vm303, %v285, 0
        %v316 = vsel %vm303, %v254, 0
        %v318 = vsel %vm303, %v286, 0
        %v320 = vsel %vm303, %v255, 0
        %v322 = vsel %vm303, %v287, 0
        %v324 = vsel %vm303, %v256, 0
        %v326 = vsel %vm303, %v288, 0
        %v328 = vsel %vm303, %v257, 0
        %v330 = vsel %vm303, %v289, 0
        %v332 = vsel %vm303, %v258, 0
        %v334 = vsel %vm303, %v290, 0
        %v336 = vsel %vm303, %v259, 0
        %v338 = vsel %vm303, %v291, 0
        %v340 = vsel %vm303, %v260, 0
        %v342 = vsel %vm303, %v292, 0
        %v344 = vsel %vm303, %v261, 0
        %v346 = vsel %vm303, %v293, 0
        %v348 = vsel %vm303, %v262, 0
        %v350 = vsel %vm303, %v294, 0
        %v352 = vsel %vm303, %v263, 0
        %v354 = vsel %vm303, %v295, 0
        %v356 = vsel %vm303, %v264, 0
        %v358 = vsel %vm303, %v296, 0
        %v360 = vsel %vm303, %v265, 0
        %v362 = vsel %vm303, %v297, 0
        %v364 = vsel %vm303, %v266, 0
        %v366 = vsel %vm303, %v298, 0
        %368 = vmatprep.subr.mxu0 0.0
        %369 = vmatpush1.msra.mxu0 0.0
        %370 = vmatprep.subr.mxu0 0.0
        %371 = vmatpush1.msra.mxu0 0.0
        %372 = vmatprep.subr.mxu0 0.0
        %373 = vmatpush1.msra.mxu0 0.0
        %374 = vmatprep.subr.mxu0 0.0
        %375 = vmatpush1.msra.mxu0 0.0
        %376 = vmatprep.subr.mxu0 0.0
        %377 = vmatpush1.msra.mxu0 0.0
        %378 = vmatprep.subr.mxu0 0.0
        %379 = vmatpush1.msra.mxu0 0.0
        %380 = vmatprep.subr.mxu0 0.0
        %381 = vmatpush1.msra.mxu0 0.0
        %382 = vmatprep.subr.mxu0 0.0
        %383 = vmatpush1.msra.mxu0 0.0
        %384 = vmatprep.subr.mxu0 0.0
        %385 = vmatpush1.msra.mxu0 0.0
        %386 = vmatprep.subr.mxu0 0.0
        %387 = vmatpush1.msra.mxu0 0.0
        %388 = vmatprep.subr.mxu0 0.0
        %389 = vmatpush1.msra.mxu0 0.0
        %390 = vmatprep.subr.mxu0 0.0
        %391 = vmatpush1.msra.mxu0 0.0
        %392 = vmatprep.subr.mxu0 0.0
        %393 = vmatpush1.msra.mxu0 0.0
        %394 = vmatprep.subr.mxu0 0.0
        %395 = vmatpush1.msra.mxu0 0.0
        %396 = vmatprep.subr.mxu0 0.0
        %397 = vmatpush1.msra.mxu0 0.0
        %398 = vmatprep.subr.mxu0 %v306
        %399 = vmatpush1.msra.mxu0 %v304
        %400 = vmatprep.subr.mxu0 0.0
        %401 = vmatpush2.msra.mxu0 0.0
        %402 = vmatprep.subr.mxu0 0.0
        %403 = vmatpush2.msra.mxu0 0.0
        %404 = vmatprep.subr.mxu0 0.0
        %405 = vmatpush2.msra.mxu0 0.0
        %406 = vmatprep.subr.mxu0 0.0
        %407 = vmatpush2.msra.mxu0 0.0
        %408 = vmatprep.subr.mxu0 0.0
        %409 = vmatpush2.msra.mxu0 0.0
        %410 = vmatprep.subr.mxu0 0.0
        %411 = vmatpush2.msra.mxu0 0.0
        %412 = vmatprep.subr.mxu0 0.0
        %413 = vmatpush2.msra.mxu0 0.0
        %414 = vmatprep.subr.mxu0 0.0
        %415 = vmatpush2.msra.mxu0 0.0
        %416 = vmatprep.subr.mxu0 0.0
        %417 = vmatpush2.msra.mxu0 0.0
        %418 = vmatprep.subr.mxu0 0.0
        %419 = vmatpush2.msra.mxu0 0.0
        %420 = vmatprep.subr.mxu0 0.0
        %421 = vmatpush2.msra.mxu0 0.0
        %422 = vmatprep.subr.mxu0 0.0
        %423 = vmatpush2.msra.mxu0 0.0
        %424 = vmatprep.subr.mxu0 0.0
        %425 = vmatpush2.msra.mxu0 0.0
        %426 = vmatprep.subr.mxu0 0.0
        %427 = vmatpush2.msra.mxu0 0.0
        %428 = vmatprep.subr.mxu0 0.0
        %429 = vmatpush2.msra.mxu0 0.0
        %430 = vmatprep.subr.mxu0 0.0
        %431 = vmatpush2.msra.mxu0 0.0
        %432 = vmatprep.mubr.f32.mxu0 0.0
        %433 = vmatmul.mubr.f32.gmra.mxu0 %v301
        %v434 = vpop.f32.mrf.mxu0
        %v435 = vadd.f32 0.0, %v434
        %v436 = vpop.f32.mrf.mxu0
        %v437 = vadd.f32 0.0, %v436
        %438 = vdwg.mxu0
        %439 = vmatprep.subr.mxu0 0.0
        %440 = vmatpush1.msra.mxu0 0.0
        %441 = vmatprep.subr.mxu0 0.0
        %442 = vmatpush1.msra.mxu0 0.0
        %443 = vmatprep.subr.mxu0 0.0
        %444 = vmatpush1.msra.mxu0 0.0
        %445 = vmatprep.subr.mxu0 0.0
        %446 = vmatpush1.msra.mxu0 0.0
        %447 = vmatprep.subr.mxu0 0.0
        %448 = vmatpush1.msra.mxu0 0.0
        %449 = vmatprep.subr.mxu0 0.0
        %450 = vmatpush1.msra.mxu0 0.0
        %451 = vmatprep.subr.mxu0 0.0
        %452 = vmatpush1.msra.mxu0 0.0
        %453 = vmatprep.subr.mxu0 0.0
        %454 = vmatpush1.msra.mxu0 0.0
        %455 = vmatprep.subr.mxu0 0.0
        %456 = vmatpush1.msra.mxu0 0.0
        %457 = vmatprep.subr.mxu0 0.0
        %458 = vmatpush1.msra.mxu0 0.0
        %459 = vmatprep.subr.mxu0 0.0
        %460 = vmatpush1.msra.mxu0 0.0
        %461 = vmatprep.subr.mxu0 0.0
        %462 = vmatpush1.msra.mxu0 0.0
        %463 = vmatprep.subr.mxu0 0.0
        %464 = vmatpush1.msra.mxu0 0.0
        %465 = vmatprep.subr.mxu0 0.0
        %466 = vmatpush1.msra.mxu0 0.0
        %467 = vmatprep.subr.mxu0 0.0
        %468 = vmatpush1.msra.mxu0 0.0
        %469 = vmatprep.subr.mxu0 %v310
        %470 = vmatpush1.msra.mxu0 %v308
        %471 = vmatprep.subr.mxu0 0.0
        %472 = vmatpush2.msra.mxu0 0.0
        %473 = vmatprep.subr.mxu0 0.0
        %474 = vmatpush2.msra.mxu0 0.0
        %475 = vmatprep.subr.mxu0 0.0
        %476 = vmatpush2.msra.mxu0 0.0
        %477 = vmatprep.subr.mxu0 0.0
        %478 = vmatpush2.msra.mxu0 0.0
        %479 = vmatprep.subr.mxu0 0.0
        %480 = vmatpush2.msra.mxu0 0.0
        %481 = vmatprep.subr.mxu0 0.0
        %482 = vmatpush2.msra.mxu0 0.0
        %483 = vmatprep.subr.mxu0 0.0
        %484 = vmatpush2.msra.mxu0 0.0
        %485 = vmatprep.subr.mxu0 0.0
        %486 = vmatpush2.msra.mxu0 0.0
        %487 = vmatprep.subr.mxu0 0.0
        %488 = vmatpush2.msra.mxu0 0.0
        %489 = vmatprep.subr.mxu0 0.0
        %490 = vmatpush2.msra.mxu0 0.0
        %491 = vmatprep.subr.mxu0 0.0
        %492 = vmatpush2.msra.mxu0 0.0
        %493 = vmatprep.subr.mxu0 0.0
        %494 = vmatpush2.msra.mxu0 0.0
        %495 = vmatprep.subr.mxu0 0.0
        %496 = vmatpush2.msra.mxu0 0.0
        %497 = vmatprep.subr.mxu0 0.0
        %498 = vmatpush2.msra.mxu0 0.0
        %499 = vmatprep.subr.mxu0 0.0
        %500 = vmatpush2.msra.mxu0 0.0
        %501 = vmatprep.subr.mxu0 0.0
        %502 = vmatpush2.msra.mxu0 0.0
        %503 = vmatprep.mubr.f32.mxu0 0.0
        %504 = vmatmul.mubr.f32.gmra.mxu0 %v301
        %v505 = vpop.f32.mrf.mxu0
        %v506 = vadd.f32 0.0, %v505
        %v507 = vpop.f32.mrf.mxu0
        %v508 = vadd.f32 0.0, %v507
        %509 = vdwg.mxu0
        %510 = vmatprep.subr.mxu0 0.0
        %511 = vmatpush1.msra.mxu0 0.0
        %512 = vmatprep.subr.mxu0 0.0
        %513 = vmatpush1.msra.mxu0 0.0
        %514 = vmatprep.subr.mxu0 0.0
        %515 = vmatpush1.msra.mxu0 0.0
        %516 = vmatprep.subr.mxu0 0.0
        %517 = vmatpush1.msra.mxu0 0.0
        %518 = vmatprep.subr.mxu0 0.0
        %519 = vmatpush1.msra.mxu0 0.0
        %520 = vmatprep.subr.mxu0 0.0
        %521 = vmatpush1.msra.mxu0 0.0
        %522 = vmatprep.subr.mxu0 0.0
        %523 = vmatpush1.msra.mxu0 0.0
        %524 = vmatprep.subr.mxu0 0.0
        %525 = vmatpush1.msra.mxu0 0.0
        %526 = vmatprep.subr.mxu0 0.0
        %527 = vmatpush1.msra.mxu0 0.0
        %528 = vmatprep.subr.mxu0 0.0
        %529 = vmatpush1.msra.mxu0 0.0
        %530 = vmatprep.subr.mxu0 0.0
        %531 = vmatpush1.msra.mxu0 0.0
        %532 = vmatprep.subr.mxu0 0.0
        %533 = vmatpush1.msra.mxu0 0.0
        %534 = vmatprep.subr.mxu0 0.0
        %535 = vmatpush1.msra.mxu0 0.0
        %536 = vmatprep.subr.mxu0 0.0
        %537 = vmatpush1.msra.mxu0 0.0
        %538 = vmatprep.subr.mxu0 0.0
        %539 = vmatpush1.msra.mxu0 0.0
        %540 = vmatprep.subr.mxu0 %v314
        %541 = vmatpush1.msra.mxu0 %v312
        %542 = vmatprep.subr.mxu0 0.0
        %543 = vmatpush2.msra.mxu0 0.0
        %544 = vmatprep.subr.mxu0 0.0
        %545 = vmatpush2.msra.mxu0 0.0
        %546 = vmatprep.subr.mxu0 0.0
        %547 = vmatpush2.msra.mxu0 0.0
        %548 = vmatprep.subr.mxu0 0.0
        %549 = vmatpush2.msra.mxu0 0.0
        %550 = vmatprep.subr.mxu0 0.0
        %551 = vmatpush2.msra.mxu0 0.0
        %552 = vmatprep.subr.mxu0 0.0
        %553 = vmatpush2.msra.mxu0 0.0
        %554 = vmatprep.subr.mxu0 0.0
        %555 = vmatpush2.msra.mxu0 0.0
        %556 = vmatprep.subr.mxu0 0.0
        %557 = vmatpush2.msra.mxu0 0.0
        %558 = vmatprep.subr.mxu0 0.0
        %559 = vmatpush2.msra.mxu0 0.0
        %560 = vmatprep.subr.mxu0 0.0
        %561 = vmatpush2.msra.mxu0 0.0
        %562 = vmatprep.subr.mxu0 0.0
        %563 = vmatpush2.msra.mxu0 0.0
        %564 = vmatprep.subr.mxu0 0.0
        %565 = vmatpush2.msra.mxu0 0.0
        %566 = vmatprep.subr.mxu0 0.0
        %567 = vmatpush2.msra.mxu0 0.0
        %568 = vmatprep.subr.mxu0 0.0
        %569 = vmatpush2.msra.mxu0 0.0
        %570 = vmatprep.subr.mxu0 0.0
        %571 = vmatpush2.msra.mxu0 0.0
        %572 = vmatprep.subr.mxu0 0.0
        %573 = vmatpush2.msra.mxu0 0.0
        %574 = vmatprep.mubr.f32.mxu0 0.0
        %575 = vmatmul.mubr.f32.gmra.mxu0 %v301
        %v576 = vpop.f32.mrf.mxu0
        %v577 = vadd.f32 0.0, %v576
        %v578 = vpop.f32.mrf.mxu0
        %v579 = vadd.f32 0.0, %v578
        %580 = vdwg.mxu0
        %581 = vmatprep.subr.mxu0 0.0
        %582 = vmatpush1.msra.mxu0 0.0
        %583 = vmatprep.subr.mxu0 0.0
        %584 = vmatpush1.msra.mxu0 0.0
        %585 = vmatprep.subr.mxu0 0.0
        %586 = vmatpush1.msra.mxu0 0.0
        %587 = vmatprep.subr.mxu0 0.0
        %588 = vmatpush1.msra.mxu0 0.0
        %589 = vmatprep.subr.mxu0 0.0
        %590 = vmatpush1.msra.mxu0 0.0
        %591 = vmatprep.subr.mxu0 0.0
        %592 = vmatpush1.msra.mxu0 0.0
        %593 = vmatprep.subr.mxu0 0.0
        %594 = vmatpush1.msra.mxu0 0.0
        %595 = vmatprep.subr.mxu0 0.0
        %596 = vmatpush1.msra.mxu0 0.0
        %597 = vmatprep.subr.mxu0 0.0
        %598 = vmatpush1.msra.mxu0 0.0
        %599 = vmatprep.subr.mxu0 0.0
        %600 = vmatpush1.msra.mxu0 0.0
        %601 = vmatprep.subr.mxu0 0.0
        %602 = vmatpush1.msra.mxu0 0.0
        %603 = vmatprep.subr.mxu0 0.0
        %604 = vmatpush1.msra.mxu0 0.0
        %605 = vmatprep.subr.mxu0 0.0
        %606 = vmatpush1.msra.mxu0 0.0
        %607 = vmatprep.subr.mxu0 0.0
        %608 = vmatpush1.msra.mxu0 0.0
        %609 = vmatprep.subr.mxu0 0.0
        %610 = vmatpush1.msra.mxu0 0.0
        %611 = vmatprep.subr.mxu0 %v318
        %612 = vmatpush1.msra.mxu0 %v316
        %613 = vmatprep.subr.mxu0 0.0
        %614 = vmatpush2.msra.mxu0 0.0
        %615 = vmatprep.subr.mxu0 0.0
        %616 = vmatpush2.msra.mxu0 0.0
        %617 = vmatprep.subr.mxu0 0.0
        %618 = vmatpush2.msra.mxu0 0.0
        %619 = vmatprep.subr.mxu0 0.0
        %620 = vmatpush2.msra.mxu0 0.0
        %621 = vmatprep.subr.mxu0 0.0
        %622 = vmatpush2.msra.mxu0 0.0
        %623 = vmatprep.subr.mxu0 0.0
        %624 = vmatpush2.msra.mxu0 0.0
        %625 = vmatprep.subr.mxu0 0.0
        %626 = vmatpush2.msra.mxu0 0.0
        %627 = vmatprep.subr.mxu0 0.0
        %628 = vmatpush2.msra.mxu0 0.0
        %629 = vmatprep.subr.mxu0 0.0
        %630 = vmatpush2.msra.mxu0 0.0
        %631 = vmatprep.subr.mxu0 0.0
        %632 = vmatpush2.msra.mxu0 0.0
        %633 = vmatprep.subr.mxu0 0.0
        %634 = vmatpush2.msra.mxu0 0.0
        %635 = vmatprep.subr.mxu0 0.0
        %636 = vmatpush2.msra.mxu0 0.0
        %637 = vmatprep.subr.mxu0 0.0
        %638 = vmatpush2.msra.mxu0 0.0
        %639 = vmatprep.subr.mxu0 0.0
        %640 = vmatpush2.msra.mxu0 0.0
        %641 = vmatprep.subr.mxu0 0.0
        %642 = vmatpush2.msra.mxu0 0.0
        %643 = vmatprep.subr.mxu0 0.0
        %644 = vmatpush2.msra.mxu0 0.0
        %645 = vmatprep.mubr.f32.mxu0 0.0
        %646 = vmatmul.mubr.f32.gmra.mxu0 %v301
        %v647 = vpop.f32.mrf.mxu0
        %v648 = vadd.f32 0.0, %v647
        %v649 = vpop.f32.mrf.mxu0
        %v650 = vadd.f32 0.0, %v649
        %651 = vdwg.mxu0
        %652 = vmatprep.subr.mxu0 0.0
        %653 = vmatpush1.msra.mxu0 0.0
        %654 = vmatprep.subr.mxu0 0.0
        %655 = vmatpush1.msra.mxu0 0.0
        %656 = vmatprep.subr.mxu0 0.0
        %657 = vmatpush1.msra.mxu0 0.0
        %658 = vmatprep.subr.mxu0 0.0
        %659 = vmatpush1.msra.mxu0 0.0
        %660 = vmatprep.subr.mxu0 0.0
        %661 = vmatpush1.msra.mxu0 0.0
        %662 = vmatprep.subr.mxu0 0.0
        %663 = vmatpush1.msra.mxu0 0.0
        %664 = vmatprep.subr.mxu0 0.0
        %665 = vmatpush1.msra.mxu0 0.0
        %666 = vmatprep.subr.mxu0 0.0
        %667 = vmatpush1.msra.mxu0 0.0
        %668 = vmatprep.subr.mxu0 0.0
        %669 = vmatpush1.msra.mxu0 0.0
        %670 = vmatprep.subr.mxu0 0.0
        %671 = vmatpush1.msra.mxu0 0.0
        %672 = vmatprep.subr.mxu0 0.0
        %673 = vmatpush1.msra.mxu0 0.0
        %674 = vmatprep.subr.mxu0 0.0
        %675 = vmatpush1.msra.mxu0 0.0
        %676 = vmatprep.subr.mxu0 0.0
        %677 = vmatpush1.msra.mxu0 0.0
        %678 = vmatprep.subr.mxu0 0.0
        %679 = vmatpush1.msra.mxu0 0.0
        %680 = vmatprep.subr.mxu0 0.0
        %681 = vmatpush1.msra.mxu0 0.0
        %682 = vmatprep.subr.mxu0 %v322
        %683 = vmatpush1.msra.mxu0 %v320
        %684 = vmatprep.subr.mxu0 0.0
        %685 = vmatpush2.msra.mxu0 0.0
        %686 = vmatprep.subr.mxu0 0.0
        %687 = vmatpush2.msra.mxu0 0.0
        %688 = vmatprep.subr.mxu0 0.0
        %689 = vmatpush2.msra.mxu0 0.0
        %690 = vmatprep.subr.mxu0 0.0
        %691 = vmatpush2.msra.mxu0 0.0
        %692 = vmatprep.subr.mxu0 0.0
        %693 = vmatpush2.msra.mxu0 0.0
        %694 = vmatprep.subr.mxu0 0.0
        %695 = vmatpush2.msra.mxu0 0.0
        %696 = vmatprep.subr.mxu0 0.0
        %697 = vmatpush2.msra.mxu0 0.0
        %698 = vmatprep.subr.mxu0 0.0
        %699 = vmatpush2.msra.mxu0 0.0
        %700 = vmatprep.subr.mxu0 0.0
        %701 = vmatpush2.msra.mxu0 0.0
        %702 = vmatprep.subr.mxu0 0.0
        %703 = vmatpush2.msra.mxu0 0.0
        %704 = vmatprep.subr.mxu0 0.0
        %705 = vmatpush2.msra.mxu0 0.0
        %706 = vmatprep.subr.mxu0 0.0
        %707 = vmatpush2.msra.mxu0 0.0
        %708 = vmatprep.subr.mxu0 0.0
        %709 = vmatpush2.msra.mxu0 0.0
        %710 = vmatprep.subr.mxu0 0.0
        %711 = vmatpush2.msra.mxu0 0.0
        %712 = vmatprep.subr.mxu0 0.0
        %713 = vmatpush2.msra.mxu0 0.0
        %714 = vmatprep.subr.mxu0 0.0
        %715 = vmatpush2.msra.mxu0 0.0
        %716 = vmatprep.mubr.f32.mxu0 0.0
        %717 = vmatmul.mubr.f32.gmra.mxu0 %v301
        %v718 = vpop.f32.mrf.mxu0
        %v719 = vadd.f32 0.0, %v718
        %v720 = vpop.f32.mrf.mxu0
        %v721 = vadd.f32 0.0, %v720
        %722 = vdwg.mxu0
        %723 = vmatprep.subr.mxu0 0.0
        %724 = vmatpush1.msra.mxu0 0.0
        %725 = vmatprep.subr.mxu0 0.0
        %726 = vmatpush1.msra.mxu0 0.0
        %727 = vmatprep.subr.mxu0 0.0
        %728 = vmatpush1.msra.mxu0 0.0
        %729 = vmatprep.subr.mxu0 0.0
        %730 = vmatpush1.msra.mxu0 0.0
        %731 = vmatprep.subr.mxu0 0.0
        %732 = vmatpush1.msra.mxu0 0.0
        %733 = vmatprep.subr.mxu0 0.0
        %734 = vmatpush1.msra.mxu0 0.0
        %735 = vmatprep.subr.mxu0 0.0
        %736 = vmatpush1.msra.mxu0 0.0
        %737 = vmatprep.subr.mxu0 0.0
        %738 = vmatpush1.msra.mxu0 0.0
        %739 = vmatprep.subr.mxu0 0.0
        %740 = vmatpush1.msra.mxu0 0.0
        %741 = vmatprep.subr.mxu0 0.0
        %742 = vmatpush1.msra.mxu0 0.0
        %743 = vmatprep.subr.mxu0 0.0
        %744 = vmatpush1.msra.mxu0 0.0
        %745 = vmatprep.subr.mxu0 0.0
        %746 = vmatpush1.msra.mxu0 0.0
        %747 = vmatprep.subr.mxu0 0.0
        %748 = vmatpush1.msra.mxu0 0.0
        %749 = vmatprep.subr.mxu0 0.0
        %750 = vmatpush1.msra.mxu0 0.0
        %751 = vmatprep.subr.mxu0 0.0
        %752 = vmatpush1.msra.mxu0 0.0
        %753 = vmatprep.subr.mxu0 %v326
        %754 = vmatpush1.msra.mxu0 %v324
        %755 = vmatprep.subr.mxu0 0.0
        %756 = vmatpush2.msra.mxu0 0.0
        %757 = vmatprep.subr.mxu0 0.0
        %758 = vmatpush2.msra.mxu0 0.0
        %759 = vmatprep.subr.mxu0 0.0
        %760 = vmatpush2.msra.mxu0 0.0
        %761 = vmatprep.subr.mxu0 0.0
        %762 = vmatpush2.msra.mxu0 0.0
        %763 = vmatprep.subr.mxu0 0.0
        %764 = vmatpush2.msra.mxu0 0.0
        %765 = vmatprep.subr.mxu0 0.0
        %766 = vmatpush2.msra.mxu0 0.0
        %767 = vmatprep.subr.mxu0 0.0
        %768 = vmatpush2.msra.mxu0 0.0
        %769 = vmatprep.subr.mxu0 0.0
        %770 = vmatpush2.msra.mxu0 0.0
        %771 = vmatprep.subr.mxu0 0.0
        %772 = vmatpush2.msra.mxu0 0.0
        %773 = vmatprep.subr.mxu0 0.0
        %774 = vmatpush2.msra.mxu0 0.0
        %775 = vmatprep.subr.mxu0 0.0
        %776 = vmatpush2.msra.mxu0 0.0
        %777 = vmatprep.subr.mxu0 0.0
        %778 = vmatpush2.msra.mxu0 0.0
        %779 = vmatprep.subr.mxu0 0.0
        %780 = vmatpush2.msra.mxu0 0.0
        %781 = vmatprep.subr.mxu0 0.0
        %782 = vmatpush2.msra.mxu0 0.0
        %783 = vmatprep.subr.mxu0 0.0
        %784 = vmatpush2.msra.mxu0 0.0
        %785 = vmatprep.subr.mxu0 0.0
        %786 = vmatpush2.msra.mxu0 0.0
        %787 = vmatprep.mubr.f32.mxu0 0.0
        %788 = vmatmul.mubr.f32.gmra.mxu0 %v301
        %v789 = vpop.f32.mrf.mxu0
        %v790 = vadd.f32 0.0, %v789
        %v791 = vpop.f32.mrf.mxu0
        %v792 = vadd.f32 0.0, %v791
        %793 = vdwg.mxu0
        %794 = vmatprep.subr.mxu0 0.0
        %795 = vmatpush1.msra.mxu0 0.0
        %796 = vmatprep.subr.mxu0 0.0
        %797 = vmatpush1.msra.mxu0 0.0
        %798 = vmatprep.subr.mxu0 0.0
        %799 = vmatpush1.msra.mxu0 0.0
        %800 = vmatprep.subr.mxu0 0.0
        %801 = vmatpush1.msra.mxu0 0.0
        %802 = vmatprep.subr.mxu0 0.0
        %803 = vmatpush1.msra.mxu0 0.0
        %804 = vmatprep.subr.mxu0 0.0
        %805 = vmatpush1.msra.mxu0 0.0
        %806 = vmatprep.subr.mxu0 0.0
        %807 = vmatpush1.msra.mxu0 0.0
        %808 = vmatprep.subr.mxu0 0.0
        %809 = vmatpush1.msra.mxu0 0.0
        %810 = vmatprep.subr.mxu0 0.0
        %811 = vmatpush1.msra.mxu0 0.0
        %812 = vmatprep.subr.mxu0 0.0
        %813 = vmatpush1.msra.mxu0 0.0
        %814 = vmatprep.subr.mxu0 0.0
        %815 = vmatpush1.msra.mxu0 0.0
        %816 = vmatprep.subr.mxu0 0.0
        %817 = vmatpush1.msra.mxu0 0.0
        %818 = vmatprep.subr.mxu0 0.0
        %819 = vmatpush1.msra.mxu0 0.0
        %820 = vmatprep.subr.mxu0 0.0
        %821 = vmatpush1.msra.mxu0 0.0
        %822 = vmatprep.subr.mxu0 0.0
        %823 = vmatpush1.msra.mxu0 0.0
        %824 = vmatprep.subr.mxu0 %v330
        %825 = vmatpush1.msra.mxu0 %v328
        %826 = vmatprep.subr.mxu0 0.0
        %827 = vmatpush2.msra.mxu0 0.0
        %828 = vmatprep.subr.mxu0 0.0
        %829 = vmatpush2.msra.mxu0 0.0
        %830 = vmatprep.subr.mxu0 0.0
        %831 = vmatpush2.msra.mxu0 0.0
        %832 = vmatprep.subr.mxu0 0.0
        %833 = vmatpush2.msra.mxu0 0.0
        %834 = vmatprep.subr.mxu0 0.0
        %835 = vmatpush2.msra.mxu0 0.0
        %836 = vmatprep.subr.mxu0 0.0
        %837 = vmatpush2.msra.mxu0 0.0
        %838 = vmatprep.subr.mxu0 0.0
        %839 = vmatpush2.msra.mxu0 0.0
        %840 = vmatprep.subr.mxu0 0.0
        %841 = vmatpush2.msra.mxu0 0.0
        %842 = vmatprep.subr.mxu0 0.0
        %843 = vmatpush2.msra.mxu0 0.0
        %844 = vmatprep.subr.mxu0 0.0
        %845 = vmatpush2.msra.mxu0 0.0
        %846 = vmatprep.subr.mxu0 0.0
        %847 = vmatpush2.msra.mxu0 0.0
        %848 = vmatprep.subr.mxu0 0.0
        %849 = vmatpush2.msra.mxu0 0.0
        %850 = vmatprep.subr.mxu0 0.0
        %851 = vmatpush2.msra.mxu0 0.0
        %852 = vmatprep.subr.mxu0 0.0
        %853 = vmatpush2.msra.mxu0 0.0
        %854 = vmatprep.subr.mxu0 0.0
        %855 = vmatpush2.msra.mxu0 0.0
        %856 = vmatprep.subr.mxu0 0.0
        %857 = vmatpush2.msra.mxu0 0.0
        %858 = vmatprep.mubr.f32.mxu0 0.0
        %859 = vmatmul.mubr.f32.gmra.mxu0 %v301
        %v860 = vpop.f32.mrf.mxu0
        %v861 = vadd.f32 0.0, %v860
        %v862 = vpop.f32.mrf.mxu0
        %v863 = vadd.f32 0.0, %v862
        %864 = vdwg.mxu0
        %865 = vmatprep.subr.mxu0 0.0
        %866 = vmatpush1.msra.mxu0 0.0
        %867 = vmatprep.subr.mxu0 0.0
        %868 = vmatpush1.msra.mxu0 0.0
        %869 = vmatprep.subr.mxu0 0.0
        %870 = vmatpush1.msra.mxu0 0.0
        %871 = vmatprep.subr.mxu0 0.0
        %872 = vmatpush1.msra.mxu0 0.0
        %873 = vmatprep.subr.mxu0 0.0
        %874 = vmatpush1.msra.mxu0 0.0
        %875 = vmatprep.subr.mxu0 0.0
        %876 = vmatpush1.msra.mxu0 0.0
        %877 = vmatprep.subr.mxu0 0.0
        %878 = vmatpush1.msra.mxu0 0.0
        %879 = vmatprep.subr.mxu0 0.0
        %880 = vmatpush1.msra.mxu0 0.0
        %881 = vmatprep.subr.mxu0 0.0
        %882 = vmatpush1.msra.mxu0 0.0
        %883 = vmatprep.subr.mxu0 0.0
        %884 = vmatpush1.msra.mxu0 0.0
        %885 = vmatprep.subr.mxu0 0.0
        %886 = vmatpush1.msra.mxu0 0.0
        %887 = vmatprep.subr.mxu0 0.0
        %888 = vmatpush1.msra.mxu0 0.0
        %889 = vmatprep.subr.mxu0 0.0
        %890 = vmatpush1.msra.mxu0 0.0
        %891 = vmatprep.subr.mxu0 0.0
        %892 = vmatpush1.msra.mxu0 0.0
        %893 = vmatprep.subr.mxu0 0.0
        %894 = vmatpush1.msra.mxu0 0.0
        %895 = vmatprep.subr.mxu0 %v334
        %896 = vmatpush1.msra.mxu0 %v332
        %897 = vmatprep.subr.mxu0 0.0
        %898 = vmatpush2.msra.mxu0 0.0
        %899 = vmatprep.subr.mxu0 0.0
        %900 = vmatpush2.msra.mxu0 0.0
        %901 = vmatprep.subr.mxu0 0.0
        %902 = vmatpush2.msra.mxu0 0.0
        %903 = vmatprep.subr.mxu0 0.0
        %904 = vmatpush2.msra.mxu0 0.0
        %905 = vmatprep.subr.mxu0 0.0
        %906 = vmatpush2.msra.mxu0 0.0
        %907 = vmatprep.subr.mxu0 0.0
        %908 = vmatpush2.msra.mxu0 0.0
        %909 = vmatprep.subr.mxu0 0.0
        %910 = vmatpush2.msra.mxu0 0.0
        %911 = vmatprep.subr.mxu0 0.0
        %912 = vmatpush2.msra.mxu0 0.0
        %913 = vmatprep.subr.mxu0 0.0
        %914 = vmatpush2.msra.mxu0 0.0
        %915 = vmatprep.subr.mxu0 0.0
        %916 = vmatpush2.msra.mxu0 0.0
        %917 = vmatprep.subr.mxu0 0.0
        %918 = vmatpush2.msra.mxu0 0.0
        %919 = vmatprep.subr.mxu0 0.0
        %920 = vmatpush2.msra.mxu0 0.0
        %921 = vmatprep.subr.mxu0 0.0
        %922 = vmatpush2.msra.mxu0 0.0
        %923 = vmatprep.subr.mxu0 0.0
        %924 = vmatpush2.msra.mxu0 0.0
        %925 = vmatprep.subr.mxu0 0.0
        %926 = vmatpush2.msra.mxu0 0.0
        %927 = vmatprep.subr.mxu0 0.0
        %928 = vmatpush2.msra.mxu0 0.0
        %929 = vmatprep.mubr.f32.mxu0 0.0
        %930 = vmatmul.mubr.f32.gmra.mxu0 %v301
        %v931 = vpop.f32.mrf.mxu0
        %v932 = vadd.f32 0.0, %v931
        %v933 = vpop.f32.mrf.mxu0
        %v934 = vadd.f32 0.0, %v933
        %935 = vdwg.mxu0
        %936 = vmatprep.subr.mxu0 0.0
        %937 = vmatpush1.msra.mxu0 0.0
        %938 = vmatprep.subr.mxu0 0.0
        %939 = vmatpush1.msra.mxu0 0.0
        %940 = vmatprep.subr.mxu0 0.0
        %941 = vmatpush1.msra.mxu0 0.0
        %942 = vmatprep.subr.mxu0 0.0
        %943 = vmatpush1.msra.mxu0 0.0
        %944 = vmatprep.subr.mxu0 0.0
        %945 = vmatpush1.msra.mxu0 0.0
        %946 = vmatprep.subr.mxu0 0.0
        %947 = vmatpush1.msra.mxu0 0.0
        %948 = vmatprep.subr.mxu0 0.0
        %949 = vmatpush1.msra.mxu0 0.0
        %950 = vmatprep.subr.mxu0 0.0
        %951 = vmatpush1.msra.mxu0 0.0
        %952 = vmatprep.subr.mxu0 0.0
        %953 = vmatpush1.msra.mxu0 0.0
        %954 = vmatprep.subr.mxu0 0.0
        %955 = vmatpush1.msra.mxu0 0.0
        %956 = vmatprep.subr.mxu0 0.0
        %957 = vmatpush1.msra.mxu0 0.0
        %958 = vmatprep.subr.mxu0 0.0
        %959 = vmatpush1.msra.mxu0 0.0
        %960 = vmatprep.subr.mxu0 0.0
        %961 = vmatpush1.msra.mxu0 0.0
        %962 = vmatprep.subr.mxu0 0.0
        %963 = vmatpush1.msra.mxu0 0.0
        %964 = vmatprep.subr.mxu0 0.0
        %965 = vmatpush1.msra.mxu0 0.0
        %966 = vmatprep.subr.mxu0 %v338
        %967 = vmatpush1.msra.mxu0 %v336
        %968 = vmatprep.subr.mxu0 0.0
        %969 = vmatpush2.msra.mxu0 0.0
        %970 = vmatprep.subr.mxu0 0.0
        %971 = vmatpush2.msra.mxu0 0.0
        %972 = vmatprep.subr.mxu0 0.0
        %973 = vmatpush2.msra.mxu0 0.0
        %974 = vmatprep.subr.mxu0 0.0
        %975 = vmatpush2.msra.mxu0 0.0
        %976 = vmatprep.subr.mxu0 0.0
        %977 = vmatpush2.msra.mxu0 0.0
        %978 = vmatprep.subr.mxu0 0.0
        %979 = vmatpush2.msra.mxu0 0.0
        %980 = vmatprep.subr.mxu0 0.0
        %981 = vmatpush2.msra.mxu0 0.0
        %982 = vmatprep.subr.mxu0 0.0
        %983 = vmatpush2.msra.mxu0 0.0
        %984 = vmatprep.subr.mxu0 0.0
        %985 = vmatpush2.msra.mxu0 0.0
        %986 = vmatprep.subr.mxu0 0.0
        %987 = vmatpush2.msra.mxu0 0.0
        %988 = vmatprep.subr.mxu0 0.0
        %989 = vmatpush2.msra.mxu0 0.0
        %990 = vmatprep.subr.mxu0 0.0
        %991 = vmatpush2.msra.mxu0 0.0
        %992 = vmatprep.subr.mxu0 0.0
        %993 = vmatpush2.msra.mxu0 0.0
        %994 = vmatprep.subr.mxu0 0.0
        %995 = vmatpush2.msra.mxu0 0.0
        %996 = vmatprep.subr.mxu0 0.0
        %997 = vmatpush2.msra.mxu0 0.0
        %998 = vmatprep.subr.mxu0 0.0
        %999 = vmatpush2.msra.mxu0 0.0
        %1000 = vmatprep.mubr.f32.mxu0 0.0
        %1001 = vmatmul.mubr.f32.gmra.mxu0 %v301
        %v1002 = vpop.f32.mrf.mxu0
        %v1003 = vadd.f32 0.0, %v1002
        %v1004 = vpop.f32.mrf.mxu0
        %v1005 = vadd.f32 0.0, %v1004
        %1006 = vdwg.mxu0
        %1007 = vmatprep.subr.mxu0 0.0
        %1008 = vmatpush1.msra.mxu0 0.0
        %1009 = vmatprep.subr.mxu0 0.0
        %1010 = vmatpush1.msra.mxu0 0.0
        %1011 = vmatprep.subr.mxu0 0.0
        %1012 = vmatpush1.msra.mxu0 0.0
        %1013 = vmatprep.subr.mxu0 0.0
        %1014 = vmatpush1.msra.mxu0 0.0
        %1015 = vmatprep.subr.mxu0 0.0
        %1016 = vmatpush1.msra.mxu0 0.0
        %1017 = vmatprep.subr.mxu0 0.0
        %1018 = vmatpush1.msra.mxu0 0.0
        %1019 = vmatprep.subr.mxu0 0.0
        %1020 = vmatpush1.msra.mxu0 0.0
        %1021 = vmatprep.subr.mxu0 0.0
        %1022 = vmatpush1.msra.mxu0 0.0
        %1023 = vmatprep.subr.mxu0 0.0
        %1024 = vmatpush1.msra.mxu0 0.0
        %1025 = vmatprep.subr.mxu0 0.0
        %1026 = vmatpush1.msra.mxu0 0.0
        %1027 = vmatprep.subr.mxu0 0.0
        %1028 = vmatpush1.msra.mxu0 0.0
        %1029 = vmatprep.subr.mxu0 0.0
        %1030 = vmatpush1.msra.mxu0 0.0
        %1031 = vmatprep.subr.mxu0 0.0
        %1032 = vmatpush1.msra.mxu0 0.0
        %1033 = vmatprep.subr.mxu0 0.0
        %1034 = vmatpush1.msra.mxu0 0.0
        %1035 = vmatprep.subr.mxu0 0.0
        %1036 = vmatpush1.msra.mxu0 0.0
        %1037 = vmatprep.subr.mxu0 %v342
        %1038 = vmatpush1.msra.mxu0 %v340
        %1039 = vmatprep.subr.mxu0 0.0
        %1040 = vmatpush2.msra.mxu0 0.0
        %1041 = vmatprep.subr.mxu0 0.0
        %1042 = vmatpush2.msra.mxu0 0.0
        %1043 = vmatprep.subr.mxu0 0.0
        %1044 = vmatpush2.msra.mxu0 0.0
        %1045 = vmatprep.subr.mxu0 0.0
        %1046 = vmatpush2.msra.mxu0 0.0
        %1047 = vmatprep.subr.mxu0 0.0
        %1048 = vmatpush2.msra.mxu0 0.0
        %1049 = vmatprep.subr.mxu0 0.0
        %1050 = vmatpush2.msra.mxu0 0.0
        %1051 = vmatprep.subr.mxu0 0.0
        %1052 = vmatpush2.msra.mxu0 0.0
        %1053 = vmatprep.subr.mxu0 0.0
        %1054 = vmatpush2.msra.mxu0 0.0
        %1055 = vmatprep.subr.mxu0 0.0
        %1056 = vmatpush2.msra.mxu0 0.0
        %1057 = vmatprep.subr.mxu0 0.0
        %1058 = vmatpush2.msra.mxu0 0.0
        %1059 = vmatprep.subr.mxu0 0.0
        %1060 = vmatpush2.msra.mxu0 0.0
        %1061 = vmatprep.subr.mxu0 0.0
        %1062 = vmatpush2.msra.mxu0 0.0
        %1063 = vmatprep.subr.mxu0 0.0
        %1064 = vmatpush2.msra.mxu0 0.0
        %1065 = vmatprep.subr.mxu0 0.0
        %1066 = vmatpush2.msra.mxu0 0.0
        %1067 = vmatprep.subr.mxu0 0.0
        %1068 = vmatpush2.msra.mxu0 0.0
        %1069 = vmatprep.subr.mxu0 0.0
        %1070 = vmatpush2.msra.mxu0 0.0
        %1071 = vmatprep.mubr.f32.mxu0 0.0
        %1072 = vmatmul.mubr.f32.gmra.mxu0 %v301
        %v1073 = vpop.f32.mrf.mxu0
        %v1074 = vadd.f32 0.0, %v1073
        %v1075 = vpop.f32.mrf.mxu0
        %v1076 = vadd.f32 0.0, %v1075
        %1077 = vdwg.mxu0
        %1078 = vmatprep.subr.mxu0 0.0
        %1079 = vmatpush1.msra.mxu0 0.0
        %1080 = vmatprep.subr.mxu0 0.0
        %1081 = vmatpush1.msra.mxu0 0.0
        %1082 = vmatprep.subr.mxu0 0.0
        %1083 = vmatpush1.msra.mxu0 0.0
        %1084 = vmatprep.subr.mxu0 0.0
        %1085 = vmatpush1.msra.mxu0 0.0
        %1086 = vmatprep.subr.mxu0 0.0
        %1087 = vmatpush1.msra.mxu0 0.0
        %1088 = vmatprep.subr.mxu0 0.0
        %1089 = vmatpush1.msra.mxu0 0.0
        %1090 = vmatprep.subr.mxu0 0.0
        %1091 = vmatpush1.msra.mxu0 0.0
        %1092 = vmatprep.subr.mxu0 0.0
        %1093 = vmatpush1.msra.mxu0 0.0
        %1094 = vmatprep.subr.mxu0 0.0
        %1095 = vmatpush1.msra.mxu0 0.0
        %1096 = vmatprep.subr.mxu0 0.0
        %1097 = vmatpush1.msra.mxu0 0.0
        %1098 = vmatprep.subr.mxu0 0.0
        %1099 = vmatpush1.msra.mxu0 0.0
        %1100 = vmatprep.subr.mxu0 0.0
        %1101 = vmatpush1.msra.mxu0 0.0
        %1102 = vmatprep.subr.mxu0 0.0
        %1103 = vmatpush1.msra.mxu0 0.0
        %1104 = vmatprep.subr.mxu0 0.0
        %1105 = vmatpush1.msra.mxu0 0.0
        %1106 = vmatprep.subr.mxu0 0.0
        %1107 = vmatpush1.msra.mxu0 0.0
        %1108 = vmatprep.subr.mxu0 %v346
        %1109 = vmatpush1.msra.mxu0 %v344
        %1110 = vmatprep.subr.mxu0 0.0
        %1111 = vmatpush2.msra.mxu0 0.0
        %1112 = vmatprep.subr.mxu0 0.0
        %1113 = vmatpush2.msra.mxu0 0.0
        %1114 = vmatprep.subr.mxu0 0.0
        %1115 = vmatpush2.msra.mxu0 0.0
        %1116 = vmatprep.subr.mxu0 0.0
        %1117 = vmatpush2.msra.mxu0 0.0
        %1118 = vmatprep.subr.mxu0 0.0
        %1119 = vmatpush2.msra.mxu0 0.0
        %1120 = vmatprep.subr.mxu0 0.0
        %1121 = vmatpush2.msra.mxu0 0.0
        %1122 = vmatprep.subr.mxu0 0.0
        %1123 = vmatpush2.msra.mxu0 0.0
        %1124 = vmatprep.subr.mxu0 0.0
        %1125 = vmatpush2.msra.mxu0 0.0
        %1126 = vmatprep.subr.mxu0 0.0
        %1127 = vmatpush2.msra.mxu0 0.0
        %1128 = vmatprep.subr.mxu0 0.0
        %1129 = vmatpush2.msra.mxu0 0.0
        %1130 = vmatprep.subr.mxu0 0.0
        %1131 = vmatpush2.msra.mxu0 0.0
        %1132 = vmatprep.subr.mxu0 0.0
        %1133 = vmatpush2.msra.mxu0 0.0
        %1134 = vmatprep.subr.mxu0 0.0
        %1135 = vmatpush2.msra.mxu0 0.0
        %1136 = vmatprep.subr.mxu0 0.0
        %1137 = vmatpush2.msra.mxu0 0.0
        %1138 = vmatprep.subr.mxu0 0.0
        %1139 = vmatpush2.msra.mxu0 0.0
        %1140 = vmatprep.subr.mxu0 0.0
        %1141 = vmatpush2.msra.mxu0 0.0
        %1142 = vmatprep.mubr.f32.mxu0 0.0
        %1143 = vmatmul.mubr.f32.gmra.mxu0 %v301
        %v1144 = vpop.f32.mrf.mxu0
        %v1145 = vadd.f32 0.0, %v1144
        %v1146 = vpop.f32.mrf.mxu0
        %v1147 = vadd.f32 0.0, %v1146
        %1148 = vdwg.mxu0
        %1149 = vmatprep.subr.mxu0 0.0
        %1150 = vmatpush1.msra.mxu0 0.0
        %1151 = vmatprep.subr.mxu0 0.0
        %1152 = vmatpush1.msra.mxu0 0.0
        %1153 = vmatprep.subr.mxu0 0.0
        %1154 = vmatpush1.msra.mxu0 0.0
        %1155 = vmatprep.subr.mxu0 0.0
        %1156 = vmatpush1.msra.mxu0 0.0
        %1157 = vmatprep.subr.mxu0 0.0
        %1158 = vmatpush1.msra.mxu0 0.0
        %1159 = vmatprep.subr.mxu0 0.0
        %1160 = vmatpush1.msra.mxu0 0.0
        %1161 = vmatprep.subr.mxu0 0.0
        %1162 = vmatpush1.msra.mxu0 0.0
        %1163 = vmatprep.subr.mxu0 0.0
        %1164 = vmatpush1.msra.mxu0 0.0
        %1165 = vmatprep.subr.mxu0 0.0
        %1166 = vmatpush1.msra.mxu0 0.0
        %1167 = vmatprep.subr.mxu0 0.0
        %1168 = vmatpush1.msra.mxu0 0.0
        %1169 = vmatprep.subr.mxu0 0.0
        %1170 = vmatpush1.msra.mxu0 0.0
        %1171 = vmatprep.subr.mxu0 0.0
        %1172 = vmatpush1.msra.mxu0 0.0
        %1173 = vmatprep.subr.mxu0 0.0
        %1174 = vmatpush1.msra.mxu0 0.0
        %1175 = vmatprep.subr.mxu0 0.0
        %1176 = vmatpush1.msra.mxu0 0.0
        %1177 = vmatprep.subr.mxu0 0.0
        %1178 = vmatpush1.msra.mxu0 0.0
        %1179 = vmatprep.subr.mxu0 %v350
        %1180 = vmatpush1.msra.mxu0 %v348
        %1181 = vmatprep.subr.mxu0 0.0
        %1182 = vmatpush2.msra.mxu0 0.0
        %1183 = vmatprep.subr.mxu0 0.0
        %1184 = vmatpush2.msra.mxu0 0.0
        %1185 = vmatprep.subr.mxu0 0.0
        %1186 = vmatpush2.msra.mxu0 0.0
        %1187 = vmatprep.subr.mxu0 0.0
        %1188 = vmatpush2.msra.mxu0 0.0
        %1189 = vmatprep.subr.mxu0 0.0
        %1190 = vmatpush2.msra.mxu0 0.0
        %1191 = vmatprep.subr.mxu0 0.0
        %1192 = vmatpush2.msra.mxu0 0.0
        %1193 = vmatprep.subr.mxu0 0.0
        %1194 = vmatpush2.msra.mxu0 0.0
        %1195 = vmatprep.subr.mxu0 0.0
        %1196 = vmatpush2.msra.mxu0 0.0
        %1197 = vmatprep.subr.mxu0 0.0
        %1198 = vmatpush2.msra.mxu0 0.0
        %1199 = vmatprep.subr.mxu0 0.0
        %1200 = vmatpush2.msra.mxu0 0.0
        %1201 = vmatprep.subr.mxu0 0.0
        %1202 = vmatpush2.msra.mxu0 0.0
        %1203 = vmatprep.subr.mxu0 0.0
        %1204 = vmatpush2.msra.mxu0 0.0
        %1205 = vmatprep.subr.mxu0 0.0
        %1206 = vmatpush2.msra.mxu0 0.0
        %1207 = vmatprep.subr.mxu0 0.0
        %1208 = vmatpush2.msra.mxu0 0.0
        %1209 = vmatprep.subr.mxu0 0.0
        %1210 = vmatpush2.msra.mxu0 0.0
        %1211 = vmatprep.subr.mxu0 0.0
        %1212 = vmatpush2.msra.mxu0 0.0
        %1213 = vmatprep.mubr.f32.mxu0 0.0
        %1214 = vmatmul.mubr.f32.gmra.mxu0 %v301
        %v1215 = vpop.f32.mrf.mxu0
        %v1216 = vadd.f32 0.0, %v1215
        %v1217 = vpop.f32.mrf.mxu0
        %v1218 = vadd.f32 0.0, %v1217
        %1219 = vdwg.mxu0
        %1220 = vmatprep.subr.mxu0 0.0
        %1221 = vmatpush1.msra.mxu0 0.0
        %1222 = vmatprep.subr.mxu0 0.0
        %1223 = vmatpush1.msra.mxu0 0.0
        %1224 = vmatprep.subr.mxu0 0.0
        %1225 = vmatpush1.msra.mxu0 0.0
        %1226 = vmatprep.subr.mxu0 0.0
        %1227 = vmatpush1.msra.mxu0 0.0
        %1228 = vmatprep.subr.mxu0 0.0
        %1229 = vmatpush1.msra.mxu0 0.0
        %1230 = vmatprep.subr.mxu0 0.0
        %1231 = vmatpush1.msra.mxu0 0.0
        %1232 = vmatprep.subr.mxu0 0.0
        %1233 = vmatpush1.msra.mxu0 0.0
        %1234 = vmatprep.subr.mxu0 0.0
        %1235 = vmatpush1.msra.mxu0 0.0
        %1236 = vmatprep.subr.mxu0 0.0
        %1237 = vmatpush1.msra.mxu0 0.0
        %1238 = vmatprep.subr.mxu0 0.0
        %1239 = vmatpush1.msra.mxu0 0.0
        %1240 = vmatprep.subr.mxu0 0.0
        %1241 = vmatpush1.msra.mxu0 0.0
        %1242 = vmatprep.subr.mxu0 0.0
        %1243 = vmatpush1.msra.mxu0 0.0
        %1244 = vmatprep.subr.mxu0 0.0
        %1245 = vmatpush1.msra.mxu0 0.0
        %1246 = vmatprep.subr.mxu0 0.0
        %1247 = vmatpush1.msra.mxu0 0.0
        %1248 = vmatprep.subr.mxu0 0.0
        %1249 = vmatpush1.msra.mxu0 0.0
        %1250 = vmatprep.subr.mxu0 %v354
        %1251 = vmatpush1.msra.mxu0 %v352
        %1252 = vmatprep.subr.mxu0 0.0
        %1253 = vmatpush2.msra.mxu0 0.0
        %1254 = vmatprep.subr.mxu0 0.0
        %1255 = vmatpush2.msra.mxu0 0.0
        %1256 = vmatprep.subr.mxu0 0.0
        %1257 = vmatpush2.msra.mxu0 0.0
        %1258 = vmatprep.subr.mxu0 0.0
        %1259 = vmatpush2.msra.mxu0 0.0
        %1260 = vmatprep.subr.mxu0 0.0
        %1261 = vmatpush2.msra.mxu0 0.0
        %1262 = vmatprep.subr.mxu0 0.0
        %1263 = vmatpush2.msra.mxu0 0.0
        %1264 = vmatprep.subr.mxu0 0.0
        %1265 = vmatpush2.msra.mxu0 0.0
        %1266 = vmatprep.subr.mxu0 0.0
        %1267 = vmatpush2.msra.mxu0 0.0
        %1268 = vmatprep.subr.mxu0 0.0
        %1269 = vmatpush2.msra.mxu0 0.0
        %1270 = vmatprep.subr.mxu0 0.0
        %1271 = vmatpush2.msra.mxu0 0.0
        %1272 = vmatprep.subr.mxu0 0.0
        %1273 = vmatpush2.msra.mxu0 0.0
        %1274 = vmatprep.subr.mxu0 0.0
        %1275 = vmatpush2.msra.mxu0 0.0
        %1276 = vmatprep.subr.mxu0 0.0
        %1277 = vmatpush2.msra.mxu0 0.0
        %1278 = vmatprep.subr.mxu0 0.0
        %1279 = vmatpush2.msra.mxu0 0.0
        %1280 = vmatprep.subr.mxu0 0.0
        %1281 = vmatpush2.msra.mxu0 0.0
        %1282 = vmatprep.subr.mxu0 0.0
        %1283 = vmatpush2.msra.mxu0 0.0
        %1284 = vmatprep.mubr.f32.mxu0 0.0
        %1285 = vmatmul.mubr.f32.gmra.mxu0 %v301
        %v1286 = vpop.f32.mrf.mxu0
        %v1287 = vadd.f32 0.0, %v1286
        %v1288 = vpop.f32.mrf.mxu0
        %v1289 = vadd.f32 0.0, %v1288
        %1290 = vdwg.mxu0
        %1291 = vmatprep.subr.mxu0 0.0
        %1292 = vmatpush1.msra.mxu0 0.0
        %1293 = vmatprep.subr.mxu0 0.0
        %1294 = vmatpush1.msra.mxu0 0.0
        %1295 = vmatprep.subr.mxu0 0.0
        %1296 = vmatpush1.msra.mxu0 0.0
        %1297 = vmatprep.subr.mxu0 0.0
        %1298 = vmatpush1.msra.mxu0 0.0
        %1299 = vmatprep.subr.mxu0 0.0
        %1300 = vmatpush1.msra.mxu0 0.0
        %1301 = vmatprep.subr.mxu0 0.0
        %1302 = vmatpush1.msra.mxu0 0.0
        %1303 = vmatprep.subr.mxu0 0.0
        %1304 = vmatpush1.msra.mxu0 0.0
        %1305 = vmatprep.subr.mxu0 0.0
        %1306 = vmatpush1.msra.mxu0 0.0
        %1307 = vmatprep.subr.mxu0 0.0
        %1308 = vmatpush1.msra.mxu0 0.0
        %1309 = vmatprep.subr.mxu0 0.0
        %1310 = vmatpush1.msra.mxu0 0.0
        %1311 = vmatprep.subr.mxu0 0.0
        %1312 = vmatpush1.msra.mxu0 0.0
        %1313 = vmatprep.subr.mxu0 0.0
        %1314 = vmatpush1.msra.mxu0 0.0
        %1315 = vmatprep.subr.mxu0 0.0
        %1316 = vmatpush1.msra.mxu0 0.0
        %1317 = vmatprep.subr.mxu0 0.0
        %1318 = vmatpush1.msra.mxu0 0.0
        %1319 = vmatprep.subr.mxu0 0.0
        %1320 = vmatpush1.msra.mxu0 0.0
        %1321 = vmatprep.subr.mxu0 %v358
        %1322 = vmatpush1.msra.mxu0 %v356
        %1323 = vmatprep.subr.mxu0 0.0
        %1324 = vmatpush2.msra.mxu0 0.0
        %1325 = vmatprep.subr.mxu0 0.0
        %1326 = vmatpush2.msra.mxu0 0.0
        %1327 = vmatprep.subr.mxu0 0.0
        %1328 = vmatpush2.msra.mxu0 0.0
        %1329 = vmatprep.subr.mxu0 0.0
        %1330 = vmatpush2.msra.mxu0 0.0
        %1331 = vmatprep.subr.mxu0 0.0
        %1332 = vmatpush2.msra.mxu0 0.0
        %1333 = vmatprep.subr.mxu0 0.0
        %1334 = vmatpush2.msra.mxu0 0.0
        %1335 = vmatprep.subr.mxu0 0.0
        %1336 = vmatpush2.msra.mxu0 0.0
        %1337 = vmatprep.subr.mxu0 0.0
        %1338 = vmatpush2.msra.mxu0 0.0
        %1339 = vmatprep.subr.mxu0 0.0
        %1340 = vmatpush2.msra.mxu0 0.0
        %1341 = vmatprep.subr.mxu0 0.0
        %1342 = vmatpush2.msra.mxu0 0.0
        %1343 = vmatprep.subr.mxu0 0.0
        %1344 = vmatpush2.msra.mxu0 0.0
        %1345 = vmatprep.subr.mxu0 0.0
        %1346 = vmatpush2.msra.mxu0 0.0
        %1347 = vmatprep.subr.mxu0 0.0
        %1348 = vmatpush2.msra.mxu0 0.0
        %1349 = vmatprep.subr.mxu0 0.0
        %1350 = vmatpush2.msra.mxu0 0.0
        %1351 = vmatprep.subr.mxu0 0.0
        %1352 = vmatpush2.msra.mxu0 0.0
        %1353 = vmatprep.subr.mxu0 0.0
        %1354 = vmatpush2.msra.mxu0 0.0
        %1355 = vmatprep.mubr.f32.mxu0 0.0
        %1356 = vmatmul.mubr.f32.gmra.mxu0 %v301
        %v1357 = vpop.f32.mrf.mxu0
        %v1358 = vadd.f32 0.0, %v1357
        %v1359 = vpop.f32.mrf.mxu0
        %v1360 = vadd.f32 0.0, %v1359
        %1361 = vdwg.mxu0
        %1362 = vmatprep.subr.mxu0 0.0
        %1363 = vmatpush1.msra.mxu0 0.0
        %1364 = vmatprep.subr.mxu0 0.0
        %1365 = vmatpush1.msra.mxu0 0.0
        %1366 = vmatprep.subr.mxu0 0.0
        %1367 = vmatpush1.msra.mxu0 0.0
        %1368 = vmatprep.subr.mxu0 0.0
        %1369 = vmatpush1.msra.mxu0 0.0
        %1370 = vmatprep.subr.mxu0 0.0
        %1371 = vmatpush1.msra.mxu0 0.0
        %1372 = vmatprep.subr.mxu0 0.0
        %1373 = vmatpush1.msra.mxu0 0.0
        %1374 = vmatprep.subr.mxu0 0.0
        %1375 = vmatpush1.msra.mxu0 0.0
        %1376 = vmatprep.subr.mxu0 0.0
        %1377 = vmatpush1.msra.mxu0 0.0
        %1378 = vmatprep.subr.mxu0 0.0
        %1379 = vmatpush1.msra.mxu0 0.0
        %1380 = vmatprep.subr.mxu0 0.0
        %1381 = vmatpush1.msra.mxu0 0.0
        %1382 = vmatprep.subr.mxu0 0.0
        %1383 = vmatpush1.msra.mxu0 0.0
        %1384 = vmatprep.subr.mxu0 0.0
        %1385 = vmatpush1.msra.mxu0 0.0
        %1386 = vmatprep.subr.mxu0 0.0
        %1387 = vmatpush1.msra.mxu0 0.0
        %1388 = vmatprep.subr.mxu0 0.0
        %1389 = vmatpush1.msra.mxu0 0.0
        %1390 = vmatprep.subr.mxu0 0.0
        %1391 = vmatpush1.msra.mxu0 0.0
        %1392 = vmatprep.subr.mxu0 %v362
        %1393 = vmatpush1.msra.mxu0 %v360
        %1394 = vmatprep.subr.mxu0 0.0
        %1395 = vmatpush2.msra.mxu0 0.0
        %1396 = vmatprep.subr.mxu0 0.0
        %1397 = vmatpush2.msra.mxu0 0.0
        %1398 = vmatprep.subr.mxu0 0.0
        %1399 = vmatpush2.msra.mxu0 0.0
        %1400 = vmatprep.subr.mxu0 0.0
        %1401 = vmatpush2.msra.mxu0 0.0
        %1402 = vmatprep.subr.mxu0 0.0
        %1403 = vmatpush2.msra.mxu0 0.0
        %1404 = vmatprep.subr.mxu0 0.0
        %1405 = vmatpush2.msra.mxu0 0.0
        %1406 = vmatprep.subr.mxu0 0.0
        %1407 = vmatpush2.msra.mxu0 0.0
        %1408 = vmatprep.subr.mxu0 0.0
        %1409 = vmatpush2.msra.mxu0 0.0
        %1410 = vmatprep.subr.mxu0 0.0
        %1411 = vmatpush2.msra.mxu0 0.0
        %1412 = vmatprep.subr.mxu0 0.0
        %1413 = vmatpush2.msra.mxu0 0.0
        %1414 = vmatprep.subr.mxu0 0.0
        %1415 = vmatpush2.msra.mxu0 0.0
        %1416 = vmatprep.subr.mxu0 0.0
        %1417 = vmatpush2.msra.mxu0 0.0
        %1418 = vmatprep.subr.mxu0 0.0
        %1419 = vmatpush2.msra.mxu0 0.0
        %1420 = vmatprep.subr.mxu0 0.0
        %1421 = vmatpush2.msra.mxu0 0.0
        %1422 = vmatprep.subr.mxu0 0.0
        %1423 = vmatpush2.msra.mxu0 0.0
        %1424 = vmatprep.subr.mxu0 0.0
        %1425 = vmatpush2.msra.mxu0 0.0
        %1426 = vmatprep.mubr.f32.mxu0 0.0
        %1427 = vmatmul.mubr.f32.gmra.mxu0 %v301
        %v1428 = vpop.f32.mrf.mxu0
        %v1429 = vadd.f32 0.0, %v1428
        %v1430 = vpop.f32.mrf.mxu0
        %v1431 = vadd.f32 0.0, %v1430
        %1432 = vdwg.mxu0
        %1433 = vmatprep.subr.mxu0 0.0
        %1434 = vmatpush1.msra.mxu0 0.0
        %1435 = vmatprep.subr.mxu0 0.0
        %1436 = vmatpush1.msra.mxu0 0.0
        %1437 = vmatprep.subr.mxu0 0.0
        %1438 = vmatpush1.msra.mxu0 0.0
        %1439 = vmatprep.subr.mxu0 0.0
        %1440 = vmatpush1.msra.mxu0 0.0
        %1441 = vmatprep.subr.mxu0 0.0
        %1442 = vmatpush1.msra.mxu0 0.0
        %1443 = vmatprep.subr.mxu0 0.0
        %1444 = vmatpush1.msra.mxu0 0.0
        %1445 = vmatprep.subr.mxu0 0.0
        %1446 = vmatpush1.msra.mxu0 0.0
        %1447 = vmatprep.subr.mxu0 0.0
        %1448 = vmatpush1.msra.mxu0 0.0
        %1449 = vmatprep.subr.mxu0 0.0
        %1450 = vmatpush1.msra.mxu0 0.0
        %1451 = vmatprep.subr.mxu0 0.0
        %1452 = vmatpush1.msra.mxu0 0.0
        %1453 = vmatprep.subr.mxu0 0.0
        %1454 = vmatpush1.msra.mxu0 0.0
        %1455 = vmatprep.subr.mxu0 0.0
        %1456 = vmatpush1.msra.mxu0 0.0
        %1457 = vmatprep.subr.mxu0 0.0
        %1458 = vmatpush1.msra.mxu0 0.0
        %1459 = vmatprep.subr.mxu0 0.0
        %1460 = vmatpush1.msra.mxu0 0.0
        %1461 = vmatprep.subr.mxu0 0.0
        %1462 = vmatpush1.msra.mxu0 0.0
        %1463 = vmatprep.subr.mxu0 %v366
        %1464 = vmatpush1.msra.mxu0 %v364
        %1465 = vmatprep.subr.mxu0 0.0
        %1466 = vmatpush2.msra.mxu0 0.0
        %1467 = vmatprep.subr.mxu0 0.0
        %1468 = vmatpush2.msra.mxu0 0.0
        %1469 = vmatprep.subr.mxu0 0.0
        %1470 = vmatpush2.msra.mxu0 0.0
        %1471 = vmatprep.subr.mxu0 0.0
        %1472 = vmatpush2.msra.mxu0 0.0
        %1473 = vmatprep.subr.mxu0 0.0
        %1474 = vmatpush2.msra.mxu0 0.0
        %1475 = vmatprep.subr.mxu0 0.0
        %1476 = vmatpush2.msra.mxu0 0.0
        %1477 = vmatprep.subr.mxu0 0.0
        %1478 = vmatpush2.msra.mxu0 0.0
        %1479 = vmatprep.subr.mxu0 0.0
        %1480 = vmatpush2.msra.mxu0 0.0
        %1481 = vmatprep.subr.mxu0 0.0
        %1482 = vmatpush2.msra.mxu0 0.0
        %1483 = vmatprep.subr.mxu0 0.0
        %1484 = vmatpush2.msra.mxu0 0.0
        %1485 = vmatprep.subr.mxu0 0.0
        %1486 = vmatpush2.msra.mxu0 0.0
        %1487 = vmatprep.subr.mxu0 0.0
        %1488 = vmatpush2.msra.mxu0 0.0
        %1489 = vmatprep.subr.mxu0 0.0
        %1490 = vmatpush2.msra.mxu0 0.0
        %1491 = vmatprep.subr.mxu0 0.0
        %1492 = vmatpush2.msra.mxu0 0.0
        %1493 = vmatprep.subr.mxu0 0.0
        %1494 = vmatpush2.msra.mxu0 0.0
        %1495 = vmatprep.subr.mxu0 0.0
        %1496 = vmatpush2.msra.mxu0 0.0
        %1497 = vmatprep.mubr.f32.mxu0 0.0
        %1498 = vmatmul.mubr.f32.gmra.mxu0 %v301
        %v1499 = vpop.f32.mrf.mxu0
        %v1500 = vadd.f32 0.0, %v1499
        %v1501 = vpop.f32.mrf.mxu0
        %v1502 = vadd.f32 0.0, %v1501
        %1503 = vdwg.mxu0
        %v1504 = vld [vmem:[%s219] sm:$0xff]
        %v1505 = vld [vmem:[%s219 + $0x8] sm:$0xff]
        %v1506 = vld [vmem:[%s219 + $0x10] sm:$0xff]
        %v1507 = vld [vmem:[%s219 + $0x18] sm:$0xff]
        %v1512 = vlaneseq
        %v1513 = vshrl.u32 %v1512, 7
        %v1514 = vsub.s32 0, %v1513
        %v1515 = vrot.slane %v1504, %v1514
        %v1516 = vlaneseq
        %v1517 = vshrl.u32 %v1516, 7
        %v1518 = vsub.s32 1, %v1517
        %v1519 = vrot.slane %v1504, %v1518
        %v1520 = vlaneseq
        %v1521 = vshrl.u32 %v1520, 7
        %v1522 = vsub.s32 2, %v1521
        %v1523 = vrot.slane %v1504, %v1522
        %v1524 = vlaneseq
        %v1525 = vshrl.u32 %v1524, 7
        %v1526 = vsub.s32 3, %v1525
        %v1527 = vrot.slane %v1504, %v1526
        %v1528 = vlaneseq
        %v1529 = vshrl.u32 %v1528, 7
        %v1530 = vsub.s32 4, %v1529
        %v1531 = vrot.slane %v1504, %v1530
        %v1532 = vlaneseq
        %v1533 = vshrl.u32 %v1532, 7
        %v1534 = vsub.s32 5, %v1533
        %v1535 = vrot.slane %v1504, %v1534
        %v1536 = vlaneseq
        %v1537 = vshrl.u32 %v1536, 7
        %v1538 = vsub.s32 6, %v1537
        %v1539 = vrot.slane %v1504, %v1538
        %v1540 = vlaneseq
        %v1541 = vshrl.u32 %v1540, 7
        %v1542 = vsub.s32 7, %v1541
        %v1543 = vrot.slane %v1504, %v1542
        %v1544 = vlaneseq
        %v1545 = vshrl.u32 %v1544, 7
        %v1546 = vsub.s32 0, %v1545
        %v1547 = vrot.slane %v1505, %v1546
        %v1548 = vlaneseq
        %v1549 = vshrl.u32 %v1548, 7
        %v1550 = vsub.s32 1, %v1549
        %v1551 = vrot.slane %v1505, %v1550
        %v1552 = vlaneseq
        %v1553 = vshrl.u32 %v1552, 7
        %v1554 = vsub.s32 2, %v1553
        %v1555 = vrot.slane %v1505, %v1554
        %v1556 = vlaneseq
        %v1557 = vshrl.u32 %v1556, 7
        %v1558 = vsub.s32 3, %v1557
        %v1559 = vrot.slane %v1505, %v1558
        %v1560 = vlaneseq
        %v1561 = vshrl.u32 %v1560, 7
        %v1562 = vsub.s32 4, %v1561
        %v1563 = vrot.slane %v1505, %v1562
        %v1564 = vlaneseq
        %v1565 = vshrl.u32 %v1564, 7
        %v1566 = vsub.s32 5, %v1565
        %v1567 = vrot.slane %v1505, %v1566
        %v1568 = vlaneseq
        %v1569 = vshrl.u32 %v1568, 7
        %v1570 = vsub.s32 6, %v1569
        %v1571 = vrot.slane %v1505, %v1570
        %v1572 = vlaneseq
        %v1573 = vshrl.u32 %v1572, 7
        %v1574 = vsub.s32 7, %v1573
        %v1575 = vrot.slane %v1505, %v1574
        %v1576 = vlaneseq
        %v1577 = vshrl.u32 %v1576, 7
        %v1578 = vsub.s32 0, %v1577
        %v1579 = vrot.slane %v1506, %v1578
        %v1580 = vlaneseq
        %v1581 = vshrl.u32 %v1580, 7
        %v1582 = vsub.s32 1, %v1581
        %v1583 = vrot.slane %v1506, %v1582
        %v1584 = vlaneseq
        %v1585 = vshrl.u32 %v1584, 7
        %v1586 = vsub.s32 2, %v1585
        %v1587 = vrot.slane %v1506, %v1586
        %v1588 = vlaneseq
        %v1589 = vshrl.u32 %v1588, 7
        %v1590 = vsub.s32 3, %v1589
        %v1591 = vrot.slane %v1506, %v1590
        %v1592 = vlaneseq
        %v1593 = vshrl.u32 %v1592, 7
        %v1594 = vsub.s32 4, %v1593
        %v1595 = vrot.slane %v1506, %v1594
        %v1596 = vlaneseq
        %v1597 = vshrl.u32 %v1596, 7
        %v1598 = vsub.s32 5, %v1597
        %v1599 = vrot.slane %v1506, %v1598
        %v1600 = vlaneseq
        %v1601 = vshrl.u32 %v1600, 7
        %v1602 = vsub.s32 6, %v1601
        %v1603 = vrot.slane %v1506, %v1602
        %v1604 = vlaneseq
        %v1605 = vshrl.u32 %v1604, 7
        %v1606 = vsub.s32 7, %v1605
        %v1607 = vrot.slane %v1506, %v1606
        %v1608 = vlaneseq
        %v1609 = vshrl.u32 %v1608, 7
        %v1610 = vsub.s32 0, %v1609
        %v1611 = vrot.slane %v1507, %v1610
        %v1612 = vlaneseq
        %v1613 = vshrl.u32 %v1612, 7
        %v1614 = vsub.s32 1, %v1613
        %v1615 = vrot.slane %v1507, %v1614
        %v1616 = vlaneseq
        %v1617 = vshrl.u32 %v1616, 7
        %v1618 = vsub.s32 2, %v1617
        %v1619 = vrot.slane %v1507, %v1618
        %v1620 = vlaneseq
        %v1621 = vshrl.u32 %v1620, 7
        %v1622 = vsub.s32 3, %v1621
        %v1623 = vrot.slane %v1507, %v1622
        %v1624 = vlaneseq
        %v1625 = vshrl.u32 %v1624, 7
        %v1626 = vsub.s32 4, %v1625
        %v1627 = vrot.slane %v1507, %v1626
        %v1628 = vlaneseq
        %v1629 = vshrl.u32 %v1628, 7
        %v1630 = vsub.s32 5, %v1629
        %v1631 = vrot.slane %v1507, %v1630
        %v1632 = vlaneseq
        %v1633 = vshrl.u32 %v1632, 7
        %v1634 = vsub.s32 6, %v1633
        %v1635 = vrot.slane %v1507, %v1634
        %v1636 = vlaneseq
        %v1637 = vshrl.u32 %v1636, 7
        %v1638 = vsub.s32 7, %v1637
        %v1639 = vrot.slane %v1507, %v1638
        %v1672 = vmul.f32 %v435, %v1515
        %v1673 = vmul.f32 %v437, %v1519
        %v1674 = vmul.f32 %v506, %v1523
        %v1675 = vmul.f32 %v508, %v1527
        %v1676 = vmul.f32 %v577, %v1531
        %v1677 = vmul.f32 %v579, %v1535
        %v1678 = vmul.f32 %v648, %v1539
        %v1679 = vmul.f32 %v650, %v1543
        %v1680 = vmul.f32 %v719, %v1547
        %v1681 = vmul.f32 %v721, %v1551
        %v1682 = vmul.f32 %v790, %v1555
        %v1683 = vmul.f32 %v792, %v1559
        %v1684 = vmul.f32 %v861, %v1563
        %v1685 = vmul.f32 %v863, %v1567
        %v1686 = vmul.f32 %v932, %v1571
        %v1687 = vmul.f32 %v934, %v1575
        %v1688 = vmul.f32 %v1003, %v1579
        %v1689 = vmul.f32 %v1005, %v1583
        %v1690 = vmul.f32 %v1074, %v1587
        %v1691 = vmul.f32 %v1076, %v1591
        %v1692 = vmul.f32 %v1145, %v1595
        %v1693 = vmul.f32 %v1147, %v1599
        %v1694 = vmul.f32 %v1216, %v1603
        %v1695 = vmul.f32 %v1218, %v1607
        %v1696 = vmul.f32 %v1287, %v1611
        %v1697 = vmul.f32 %v1289, %v1615
        %v1698 = vmul.f32 %v1358, %v1619
        %v1699 = vmul.f32 %v1360, %v1623
        %v1700 = vmul.f32 %v1429, %v1627
        %v1701 = vmul.f32 %v1431, %v1631
        %v1702 = vmul.f32 %v1500, %v1635
        %v1703 = vmul.f32 %v1502, %v1639
        %1704 = vst [vmem:[%s246] sm:$0xff] %v1672
        %1705 = vst [vmem:[%s246 + $0x8] sm:$0xff] %v1673
        %1706 = vst [vmem:[%s246 + $0x10] sm:$0xff] %v1674
        %1707 = vst [vmem:[%s246 + $0x18] sm:$0xff] %v1675
        %1708 = vst [vmem:[%s246 + $0x20] sm:$0xff] %v1676
        %1709 = vst [vmem:[%s246 + $0x28] sm:$0xff] %v1677
        %1710 = vst [vmem:[%s246 + $0x30] sm:$0xff] %v1678
        %1711 = vst [vmem:[%s246 + $0x38] sm:$0xff] %v1679
        %1712 = vst [vmem:[%s246 + $0x40] sm:$0xff] %v1680
        %1713 = vst [vmem:[%s246 + $0x48] sm:$0xff] %v1681
        %1714 = vst [vmem:[%s246 + $0x50] sm:$0xff] %v1682
        %1715 = vst [vmem:[%s246 + $0x58] sm:$0xff] %v1683
        %1716 = vst [vmem:[%s246 + $0x60] sm:$0xff] %v1684
        %1717 = vst [vmem:[%s246 + $0x68] sm:$0xff] %v1685
        %1718 = vst [vmem:[%s246 + $0x70] sm:$0xff] %v1686
        %1719 = vst [vmem:[%s246 + $0x78] sm:$0xff] %v1687
        %1720 = vst [vmem:[%s246 + $0x80] sm:$0xff] %v1688
        %1721 = vst [vmem:[%s246 + $0x88] sm:$0xff] %v1689
        %1722 = vst [vmem:[%s246 + $0x90] sm:$0xff] %v1690
        %1723 = vst [vmem:[%s246 + $0x98] sm:$0xff] %v1691
        %1724 = vst [vmem:[%s246 + $0xa0] sm:$0xff] %v1692
        %1725 = vst [vmem:[%s246 + $0xa8] sm:$0xff] %v1693
        %1726 = vst [vmem:[%s246 + $0xb0] sm:$0xff] %v1694
        %1727 = vst [vmem:[%s246 + $0xb8] sm:$0xff] %v1695
        %1728 = vst [vmem:[%s246 + $0xc0] sm:$0xff] %v1696
        %1729 = vst [vmem:[%s246 + $0xc8] sm:$0xff] %v1697
        %1730 = vst [vmem:[%s246 + $0xd0] sm:$0xff] %v1698
        %1731 = vst [vmem:[%s246 + $0xd8] sm:$0xff] %v1699
        %1732 = vst [vmem:[%s246 + $0xe0] sm:$0xff] %v1700
        %1733 = vst [vmem:[%s246 + $0xe8] sm:$0xff] %v1701
        %1734 = vst [vmem:[%s246 + $0xf0] sm:$0xff] %v1702
        %1735 = vst [vmem:[%s246 + $0xf8] sm:$0xff] %v1703
        %s1736 = sand.u32 %s122, 1
        %s1737 = scalar_lea.sflag [#allocation4], %s1736
        %s1738 = sand.u32 %s122, 1
        %s1739 = smul.addr %s1738, 256
        %s1740 = scalar_lea.vmem [#allocation7], %s1739
        // Predicated region
        $region41: #{tpu_custom_call.1} parent=31 // pred_check
          %p1741 = pneg %p132
        $region42: #{tpu_custom_call.1} parent=31 // pred_check_branch
          %1743 = sbr.rel (%p1741) target = $region44
        $region43: #{tpu_custom_call.1} parent=31 // pred_region
          %s1744 = smul.u32 32, %s28
          %s1746 = ssub.s32 4096, 4096
          %1747 = vsyncadd %s1737, %s1746
          %s1748 = smul.addr %s27, 32
          %s1749 = sadd.s32 %s1744, %s1748
          %s1750 = smul.addr %s1749, 128
          %s1751 = scalar_lea.hbm %s3, %s1750
          %s1753 = sshll.u32 %s1740, 4
          %s1754 = int_to_ptr.vmem [resolvable:$true] %s1753
          %1756 = dma.vmem_to_hbm [thread:$0]  %s1754, 4096, %s1751, %s1737
        $region44: #{tpu_custom_call.1} parent=31 // pred_fallthru
          _
      $region32: #{tpu_custom_call.1} parent=5 // pred_fallthru
        _
      %p1757 = scmp.le.s32.totalorder 2, %s18
      // Predicated region
      $region45: #{tpu_custom_call.1} parent=5 // pred_check
        %p1758 = pneg %p1757
      $region46: #{tpu_custom_call.1} parent=5 // pred_check_branch
        %1760 = sbr.rel (%p1758) target = $region48
      $region47: #{tpu_custom_call.1} parent=5 // pred_region
        %s1761 = ssub.s32 %s18, 2
        // Predicated region
        $region49: #{tpu_custom_call.1} parent=47 // pred_check
          %p1762 = pneg %p138
        $region50: #{tpu_custom_call.1} parent=47 // pred_check_branch
          %1764 = sbr.rel (%p1762) target = $region52
        $region51: #{tpu_custom_call.1} parent=47 // pred_region
          %s1765 = sand.u32 %s123, 1
          %s1766 = scalar_lea.sflag [#allocation4], %s1765
          %s1767 = sand.u32 %s123, 1
          %s1768 = smul.addr %s1767, 256
          %s1769 = scalar_lea.vmem [#allocation7], %s1768
          %1770 = dma.done %s1766, 4096
        $region52: #{tpu_custom_call.1} parent=47 // pred_fallthru
          _
      $region48: #{tpu_custom_call.1} parent=5 // pred_fallthru
        _
    $region6: #{tpu_custom_call.1} parent=1 // loop_footer
      %s22 = sadd.s32 1, %s18
    $region7: #{tpu_custom_call.1} parent=1 // loop_footer_branch
      %17 = sbr.rel target = $region3
    $region8: #{tpu_custom_call.1} parent=1 // loop_exit
      _
    %1771 = vsyncpa [#allocation3], 1
    %s1772 = scalar_lea.sflag [#allocation3], 1
    %1773 = vsyncpa %s1772, 1
    %1774 = vsyncpa [#allocation6], 1
    %s1775 = scalar_lea.sflag [#allocation6], 1
    %1776 = vsyncpa %s1775, 1
    %1777 = vsyncpa [#allocation4], 1
    %s1778 = scalar_lea.sflag [#allocation4], 1
    %1779 = vsyncpa %s1778, 1

</llo_original>
